<compile_context>
chip_gen: v7x
topology: tpu7x:2x2x1
jax: 0.10.0
libtpu: 0.0.40
codegen_flags: <defaults>
</compile_context>

<pallas_src>
import jax
import jax.numpy as jnp
from jax import lax
from jax.experimental import pallas as pl
from jax.experimental.pallas import tpu as pltpu


def _round_up(x, m):
    return (x + m - 1) // m * m


def _lstm_fc_kernel(x_ref, wih_ref, whh_ref, b_ref, wfc_ref, bfc_ref,
                    out_ref, xproj_sc):
    S, Bp, Ip = x_ref.shape
    Hp = whh_ref.shape[0]

    # (1) Hoisted input projection for the whole sequence: one big MXU matmul,
    #     bias (b_ih + b_hh) folded in once.
    x_all = x_ref[...].reshape(S * Bp, Ip)
    xproj_sc[...] = (
        jnp.dot(x_all, wih_ref[...], preferred_element_type=jnp.float32)
        + b_ref[...]
    ).reshape(S, Bp, 4 * Hp)

    whh = whh_ref[...]  # resident value across the recurrence

    def step(t, carry):
        h, c = carry
        gates = xproj_sc[t] + jnp.dot(h, whh,
                                      preferred_element_type=jnp.float32)
        # PyTorch gate order i, f, g, o; each block is Hp (multiple of 128)
        # lanes wide -> whole-vreg, lane-aligned slices.
        i_g = jax.nn.sigmoid(gates[:, 0 * Hp:1 * Hp])
        f_g = jax.nn.sigmoid(gates[:, 1 * Hp:2 * Hp])
        g_g = jnp.tanh(gates[:, 2 * Hp:3 * Hp])
        o_g = jax.nn.sigmoid(gates[:, 3 * Hp:4 * Hp])
        c_new = f_g * c + i_g * g_g
        h_new = o_g * jnp.tanh(c_new)
        return (h_new, c_new)

    h0 = jnp.zeros((Bp, Hp), jnp.float32)
    c0 = jnp.zeros((Bp, Hp), jnp.float32)
    h_T, _ = lax.fori_loop(0, S, step, (h0, c0), unroll=True)

    # (2) Final fc with a lane-padded N (=128) so stores are unmasked; only
    #     column 0 is meaningful (wrapper slices it out).
    out_ref[...] = (
        jnp.dot(h_T, wfc_ref[...], preferred_element_type=jnp.float32)
        + bfc_ref[...]
    ).astype(out_ref.dtype)


def lstm_fc_forward(x, w_ih, w_hh, b_ih, b_hh, w_fc, b_fc):
    """x: (B, S, I) float32.  Returns fc(h_T): (B, 1) float32."""
    B, S, I = x.shape
    H = w_hh.shape[1]

    Bp = _round_up(B, 8)      # sublane granule
    Hp = _round_up(H, 128)    # lane granule per gate block
    Ip = _round_up(I, 128)    # lane granule for the input projection
    Np = 128                  # lane-padded fc output width

    # x: (B, S, I) -> (S, Bp, Ip), zero padded (padded rows/lanes are inert).
    x_sbi = jnp.transpose(x, (1, 0, 2))
    x_sbi = jnp.pad(x_sbi, ((0, 0), (0, Bp - B), (0, Ip - I)))

    # Weights packed so each gate (i,f,g,o) gets its own Hp-wide, lane-aligned
    # column block of the 4*Hp output dim; zero-padded rows/cols are inert.
    def pack_w(w, in_dim, in_pad):
        w4 = w.reshape(4, H, in_dim)              # PyTorch packing: [Wi;Wf;Wg;Wo]
        w4 = jnp.transpose(w4, (2, 0, 1))         # (in, 4, H)
        w4 = jnp.pad(w4, ((0, in_pad - in_dim), (0, 0), (0, Hp - H)))
        return w4.reshape(in_pad, 4 * Hp)

    wih_p = pack_w(w_ih, I, Ip)                   # (Ip, 4Hp)
    whh_p = pack_w(w_hh, H, Hp)                   # (Hp, 4Hp)

    b = (b_ih + b_hh).reshape(4, H)
    b = jnp.pad(b, ((0, 0), (0, Hp - H))).reshape(1, 4 * Hp)

    wfc_p = jnp.pad(jnp.transpose(w_fc), ((0, Hp - H), (0, Np - 1)))  # (Hp, Np)
    bfc_p = jnp.pad(b_fc.reshape(1, 1), ((0, 0), (0, Np - 1)))        # (1, Np)

    out = pl.pallas_call(
        _lstm_fc_kernel,
        out_shape=jax.ShapeDtypeStruct((Bp, Np), jnp.float32),
        in_specs=[pl.BlockSpec(memory_space=pltpu.MemorySpace.VMEM)] * 6,
        out_specs=pl.BlockSpec(memory_space=pltpu.MemorySpace.VMEM),
        scratch_shapes=[pltpu.VMEM((S, Bp, 4 * Hp), jnp.float32)],  # hoisted X@W_ih^T
    )(x_sbi, wih_p, whh_p, b, wfc_p, bfc_p)

    return out[:B, :1]


def _reference_forward(x, w_ih, w_hh, b_ih, b_hh, w_fc, b_fc):
    """Pure-JAX reference matching PyTorch nn.LSTM + Linear semantics."""
    B, S, I = x.shape
    H = w_hh.shape[1]
    b = b_ih + b_hh

    def step(carry, x_t):
        h, c = carry
        gates = x_t @ w_ih.T + h @ w_hh.T + b
        i = jax.nn.sigmoid(gates[:, 0:H])
        f = jax.nn.sigmoid(gates[:, H:2 * H])
        g = jnp.tanh(gates[:, 2 * H:3 * H])
        o = jax.nn.sigmoid(gates[:, 3 * H:4 * H])
        c = f * c + i * g
        h = o * jnp.tanh(c)
        return (h, c), None

    h0 = jnp.zeros((B, H), jnp.float32)
    c0 = jnp.zeros((B, H), jnp.float32)
    (hT, _), _ = jax.lax.scan(step, (h0, c0), jnp.transpose(x, (1, 0, 2)))
    return hT @ w_fc.T + b_fc


if __name__ == "__main__":
    # small shapes consistent with the module
    B, S, I, H = 2, 8, 8, 32

    key = jax.random.PRNGKey(0)
    ks = jax.random.split(key, 7)
    scale = 1.0 / jnp.sqrt(H)
    x    = jax.random.normal(ks[0], (B, S, I), jnp.float32)
    w_ih = jax.random.uniform(ks[1], (4 * H, I), jnp.float32, -scale, scale)
    w_hh = jax.random.uniform(ks[2], (4 * H, H), jnp.float32, -scale, scale)
    b_ih = jax.random.uniform(ks[3], (4 * H,), jnp.float32, -scale, scale)
    b_hh = jax.random.uniform(ks[4], (4 * H,), jnp.float32, -scale, scale)
    w_fc = jax.random.uniform(ks[5], (1, H), jnp.float32, -scale, scale)
    b_fc = jax.random.uniform(ks[6], (1,), jnp.float32, -scale, scale)

    out = lstm_fc_forward(x, w_ih, w_hh, b_ih, b_hh, w_fc, b_fc)
    out = jax.block_until_ready(out)

    ref = _reference_forward(x, w_ih, w_hh, b_ih, b_hh, w_fc, b_fc)
    assert out.shape == (B, 1)
    assert jnp.allclose(out, ref, atol=1e-5, rtol=1e-5), (out, ref)

    print("KERNEL_OK")
</pallas_src>

<mosaic_0001>
module attributes {stable_mosaic.version = 11 : i64} {
  func.func @_lstm_fc_kernel(%arg0: memref<8x8x128xf32, #tpu.memory_space<vmem>>, %arg1: memref<128x512xf32, #tpu.memory_space<vmem>>, %arg2: memref<128x512xf32, #tpu.memory_space<vmem>>, %arg3: memref<1x512xf32, #tpu.memory_space<vmem>>, %arg4: memref<128x128xf32, #tpu.memory_space<vmem>>, %arg5: memref<1x128xf32, #tpu.memory_space<vmem>>, %arg6: memref<8x128xf32, #tpu.memory_space<vmem>>, %arg7: memref<8x8x512xf32, #tpu.memory_space<vmem>>) attributes {dimension_semantics = [], scalar_prefetch = 0 : i64, scratch_operands = 1 : i64, tpu.core_type = #tpu.core_type<tc>} {
    %c0 = arith.constant 0 : index
    %c0_0 = arith.constant 0 : index
    %c0_1 = arith.constant 0 : index
    %0 = vector.load %arg0[%c0, %c0_0, %c0_1] : memref<8x8x128xf32, #tpu.memory_space<vmem>>, vector<8x8x128xf32>
    %1 = vector.shape_cast %0 : vector<8x8x128xf32> to vector<64x128xf32>
    %c0_2 = arith.constant 0 : index
    %c0_3 = arith.constant 0 : index
    %2 = vector.load %arg1[%c0_2, %c0_3] : memref<128x512xf32, #tpu.memory_space<vmem>>, vector<128x512xf32>
    %cst = arith.constant dense<0.000000e+00> : vector<64x512xf32>
    %3 = tpu.matmul %1, %2, %cst {dimension_numbers = #tpu.dot_dimension_numbers<[1], [0], [0], [1], [0, 0, 1, 1], [], []>} : vector<64x128xf32>, vector<128x512xf32>, vector<64x512xf32> -> vector<64x512xf32>
    %c0_4 = arith.constant 0 : index
    %c0_5 = arith.constant 0 : index
    %4 = vector.load %arg3[%c0_4, %c0_5] : memref<1x512xf32, #tpu.memory_space<vmem>>, vector<1x512xf32>
    %5 = vector.broadcast %4 : vector<1x512xf32> to vector<64x512xf32>
    %6 = arith.addf %3, %5 : vector<64x512xf32>
    %7 = vector.shape_cast %6 : vector<64x512xf32> to vector<8x8x512xf32>
    %c0_6 = arith.constant 0 : index
    %c0_7 = arith.constant 0 : index
    %c0_8 = arith.constant 0 : index
    %8 = vector.load %arg7[%c0_6, %c0_7, %c0_8] : memref<8x8x512xf32, #tpu.memory_space<vmem>>, vector<8x8x512xf32>
    tpu.vector_store %arg7[%c0_6, %c0_7, %c0_8], %7 {strides = array<i32>} : memref<8x8x512xf32, #tpu.memory_space<vmem>>, vector<8x8x512xf32>,
    %c0_9 = arith.constant 0 : index
    %c0_10 = arith.constant 0 : index
    %9 = vector.load %arg2[%c0_9, %c0_10] : memref<128x512xf32, #tpu.memory_space<vmem>>, vector<128x512xf32>
    %cst_11 = arith.constant 0.000000e+00 : f32
    %10 = vector.broadcast %cst_11 : f32 to vector<8x128xf32>
    %cst_12 = arith.constant 0.000000e+00 : f32
    %11 = vector.broadcast %cst_12 : f32 to vector<8x128xf32>
    %c0_i32 = arith.constant 0 : i32
    %12 = arith.index_cast %c0_i32 : i32 to index
    %c0_13 = arith.constant 0 : index
    %c0_14 = arith.constant 0 : index
    %13 = vector.load %arg7[%12, %c0_13, %c0_14] : memref<8x8x512xf32, #tpu.memory_space<vmem>>, vector<1x8x512xf32>
    %14 = vector.shape_cast %13 : vector<1x8x512xf32> to vector<8x512xf32>
    %cst_15 = arith.constant dense<0.000000e+00> : vector<8x512xf32>
    %15 = tpu.matmul %10, %9, %cst_15 {dimension_numbers = #tpu.dot_dimension_numbers<[1], [0], [0], [1], [0, 0, 1, 1], [], []>} : vector<8x128xf32>, vector<128x512xf32>, vector<8x512xf32> -> vector<8x512xf32>
    %16 = arith.addf %14, %15 : vector<8x512xf32>
    %17 = vector.extract_strided_slice %16 {offsets = [0, 0], sizes = [8, 128], strides = [1, 1]} : vector<8x512xf32> to vector<8x128xf32>
    %18 = arith.negf %17 : vector<8x128xf32>
    %19 = math.exp %18 : vector<8x128xf32>
    %cst_16 = arith.constant 1.000000e+00 : f32
    %20 = vector.broadcast %cst_16 : f32 to vector<8x128xf32>
    %21 = arith.addf %20, %19 : vector<8x128xf32>
    %22 = arith.divf %20, %21 : vector<8x128xf32>
    %23 = vector.extract_strided_slice %16 {offsets = [0, 128], sizes = [8, 128], strides = [1, 1]} : vector<8x512xf32> to vector<8x128xf32>
    %24 = arith.negf %23 : vector<8x128xf32>
    %25 = math.exp %24 : vector<8x128xf32>
    %cst_17 = arith.constant 1.000000e+00 : f32
    %26 = vector.broadcast %cst_17 : f32 to vector<8x128xf32>
    %27 = arith.addf %26, %25 : vector<8x128xf32>
    %28 = arith.divf %26, %27 : vector<8x128xf32>
    %29 = vector.extract_strided_slice %16 {offsets = [0, 256], sizes = [8, 128], strides = [1, 1]} : vector<8x512xf32> to vector<8x128xf32>
    %30 = math.tanh %29 : vector<8x128xf32>
    %31 = vector.extract_strided_slice %16 {offsets = [0, 384], sizes = [8, 128], strides = [1, 1]} : vector<8x512xf32> to vector<8x128xf32>
    %32 = arith.negf %31 : vector<8x128xf32>
    %33 = math.exp %32 : vector<8x128xf32>
    %cst_18 = arith.constant 1.000000e+00 : f32
    %34 = vector.broadcast %cst_18 : f32 to vector<8x128xf32>
    %35 = arith.addf %34, %33 : vector<8x128xf32>
    %36 = arith.divf %34, %35 : vector<8x128xf32>
    %37 = arith.mulf %28, %11 : vector<8x128xf32>
    %38 = arith.mulf %22, %30 : vector<8x128xf32>
    %39 = arith.addf %37, %38 : vector<8x128xf32>
    %40 = math.tanh %39 : vector<8x128xf32>
    %41 = arith.mulf %36, %40 : vector<8x128xf32>
    %c1_i32 = arith.constant 1 : i32
    %42 = arith.index_cast %c1_i32 : i32 to index
    %c0_19 = arith.constant 0 : index
    %c0_20 = arith.constant 0 : index
    %43 = vector.load %arg7[%42, %c0_19, %c0_20] : memref<8x8x512xf32, #tpu.memory_space<vmem>>, vector<1x8x512xf32>
    %44 = vector.shape_cast %43 : vector<1x8x512xf32> to vector<8x512xf32>
    %cst_21 = arith.constant dense<0.000000e+00> : vector<8x512xf32>
    %45 = tpu.matmul %41, %9, %cst_21 {dimension_numbers = #tpu.dot_dimension_numbers<[1], [0], [0], [1], [0, 0, 1, 1], [], []>} : vector<8x128xf32>, vector<128x512xf32>, vector<8x512xf32> -> vector<8x512xf32>
    %46 = arith.addf %44, %45 : vector<8x512xf32>
    %47 = vector.extract_strided_slice %46 {offsets = [0, 0], sizes = [8, 128], strides = [1, 1]} : vector<8x512xf32> to vector<8x128xf32>
    %48 = arith.negf %47 : vector<8x128xf32>
    %49 = math.exp %48 : vector<8x128xf32>
    %cst_22 = arith.constant 1.000000e+00 : f32
    %50 = vector.broadcast %cst_22 : f32 to vector<8x128xf32>
    %51 = arith.addf %50, %49 : vector<8x128xf32>
    %52 = arith.divf %50, %51 : vector<8x128xf32>
    %53 = vector.extract_strided_slice %46 {offsets = [0, 128], sizes = [8, 128], strides = [1, 1]} : vector<8x512xf32> to vector<8x128xf32>
    %54 = arith.negf %53 : vector<8x128xf32>
    %55 = math.exp %54 : vector<8x128xf32>
    %cst_23 = arith.constant 1.000000e+00 : f32
    %56 = vector.broadcast %cst_23 : f32 to vector<8x128xf32>
    %57 = arith.addf %56, %55 : vector<8x128xf32>
    %58 = arith.divf %56, %57 : vector<8x128xf32>
    %59 = vector.extract_strided_slice %46 {offsets = [0, 256], sizes = [8, 128], strides = [1, 1]} : vector<8x512xf32> to vector<8x128xf32>
    %60 = math.tanh %59 : vector<8x128xf32>
    %61 = vector.extract_strided_slice %46 {offsets = [0, 384], sizes = [8, 128], strides = [1, 1]} : vector<8x512xf32> to vector<8x128xf32>
    %62 = arith.negf %61 : vector<8x128xf32>
    %63 = math.exp %62 : vector<8x128xf32>
    %cst_24 = arith.constant 1.000000e+00 : f32
    %64 = vector.broadcast %cst_24 : f32 to vector<8x128xf32>
    %65 = arith.addf %64, %63 : vector<8x128xf32>
    %66 = arith.divf %64, %65 : vector<8x128xf32>
    %67 = arith.mulf %58, %39 : vector<8x128xf32>
    %68 = arith.mulf %52, %60 : vector<8x128xf32>
    %69 = arith.addf %67, %68 : vector<8x128xf32>
    %70 = math.tanh %69 : vector<8x128xf32>
    %71 = arith.mulf %66, %70 : vector<8x128xf32>
    %c2_i32 = arith.constant 2 : i32
    %72 = arith.index_cast %c2_i32 : i32 to index
    %c0_25 = arith.constant 0 : index
    %c0_26 = arith.constant 0 : index
    %73 = vector.load %arg7[%72, %c0_25, %c0_26] : memref<8x8x512xf32, #tpu.memory_space<vmem>>, vector<1x8x512xf32>
    %74 = vector.shape_cast %73 : vector<1x8x512xf32> to vector<8x512xf32>
    %cst_27 = arith.constant dense<0.000000e+00> : vector<8x512xf32>
    %75 = tpu.matmul %71, %9, %cst_27 {dimension_numbers = #tpu.dot_dimension_numbers<[1], [0], [0], [1], [0, 0, 1, 1], [], []>} : vector<8x128xf32>, vector<128x512xf32>, vector<8x512xf32> -> vector<8x512xf32>
    %76 = arith.addf %74, %75 : vector<8x512xf32>
    %77 = vector.extract_strided_slice %76 {offsets = [0, 0], sizes = [8, 128], strides = [1, 1]} : vector<8x512xf32> to vector<8x128xf32>
    %78 = arith.negf %77 : vector<8x128xf32>
    %79 = math.exp %78 : vector<8x128xf32>
    %cst_28 = arith.constant 1.000000e+00 : f32
    %80 = vector.broadcast %cst_28 : f32 to vector<8x128xf32>
    %81 = arith.addf %80, %79 : vector<8x128xf32>
    %82 = arith.divf %80, %81 : vector<8x128xf32>
    %83 = vector.extract_strided_slice %76 {offsets = [0, 128], sizes = [8, 128], strides = [1, 1]} : vector<8x512xf32> to vector<8x128xf32>
    %84 = arith.negf %83 : vector<8x128xf32>
    %85 = math.exp %84 : vector<8x128xf32>
    %cst_29 = arith.constant 1.000000e+00 : f32
    %86 = vector.broadcast %cst_29 : f32 to vector<8x128xf32>
    %87 = arith.addf %86, %85 : vector<8x128xf32>
    %88 = arith.divf %86, %87 : vector<8x128xf32>
    %89 = vector.extract_strided_slice %76 {offsets = [0, 256], sizes = [8, 128], strides = [1, 1]} : vector<8x512xf32> to vector<8x128xf32>
    %90 = math.tanh %89 : vector<8x128xf32>
    %91 = vector.extract_strided_slice %76 {offsets = [0, 384], sizes = [8, 128], strides = [1, 1]} : vector<8x512xf32> to vector<8x128xf32>
    %92 = arith.negf %91 : vector<8x128xf32>
    %93 = math.exp %92 : vector<8x128xf32>
    %cst_30 = arith.constant 1.000000e+00 : f32
    %94 = vector.broadcast %cst_30 : f32 to vector<8x128xf32>
    %95 = arith.addf %94, %93 : vector<8x128xf32>
    %96 = arith.divf %94, %95 : vector<8x128xf32>
    %97 = arith.mulf %88, %69 : vector<8x128xf32>
    %98 = arith.mulf %82, %90 : vector<8x128xf32>
    %99 = arith.addf %97, %98 : vector<8x128xf32>
    %100 = math.tanh %99 : vector<8x128xf32>
    %101 = arith.mulf %96, %100 : vector<8x128xf32>
    %c3_i32 = arith.constant 3 : i32
    %102 = arith.index_cast %c3_i32 : i32 to index
    %c0_31 = arith.constant 0 : index
    %c0_32 = arith.constant 0 : index
    %103 = vector.load %arg7[%102, %c0_31, %c0_32] : memref<8x8x512xf32, #tpu.memory_space<vmem>>, vector<1x8x512xf32>
    %104 = vector.shape_cast %103 : vector<1x8x512xf32> to vector<8x512xf32>
    %cst_33 = arith.constant dense<0.000000e+00> : vector<8x512xf32>
    %105 = tpu.matmul %101, %9, %cst_33 {dimension_numbers = #tpu.dot_dimension_numbers<[1], [0], [0], [1], [0, 0, 1, 1], [], []>} : vector<8x128xf32>, vector<128x512xf32>, vector<8x512xf32> -> vector<8x512xf32>
    %106 = arith.addf %104, %105 : vector<8x512xf32>
    %107 = vector.extract_strided_slice %106 {offsets = [0, 0], sizes = [8, 128], strides = [1, 1]} : vector<8x512xf32> to vector<8x128xf32>
    %108 = arith.negf %107 : vector<8x128xf32>
    %109 = math.exp %108 : vector<8x128xf32>
    %cst_34 = arith.constant 1.000000e+00 : f32
    %110 = vector.broadcast %cst_34 : f32 to vector<8x128xf32>
    %111 = arith.addf %110, %109 : vector<8x128xf32>
    %112 = arith.divf %110, %111 : vector<8x128xf32>
    %113 = vector.extract_strided_slice %106 {offsets = [0, 128], sizes = [8, 128], strides = [1, 1]} : vector<8x512xf32> to vector<8x128xf32>
    %114 = arith.negf %113 : vector<8x128xf32>
    %115 = math.exp %114 : vector<8x128xf32>
    %cst_35 = arith.constant 1.000000e+00 : f32
    %116 = vector.broadcast %cst_35 : f32 to vector<8x128xf32>
    %117 = arith.addf %116, %115 : vector<8x128xf32>
    %118 = arith.divf %116, %117 : vector<8x128xf32>
    %119 = vector.extract_strided_slice %106 {offsets = [0, 256], sizes = [8, 128], strides = [1, 1]} : vector<8x512xf32> to vector<8x128xf32>
    %120 = math.tanh %119 : vector<8x128xf32>
    %121 = vector.extract_strided_slice %106 {offsets = [0, 384], sizes = [8, 128], strides = [1, 1]} : vector<8x512xf32> to vector<8x128xf32>
    %122 = arith.negf %121 : vector<8x128xf32>
    %123 = math.exp %122 : vector<8x128xf32>
    %cst_36 = arith.constant 1.000000e+00 : f32
    %124 = vector.broadcast %cst_36 : f32 to vector<8x128xf32>
    %125 = arith.addf %124, %123 : vector<8x128xf32>
    %126 = arith.divf %124, %125 : vector<8x128xf32>
    %127 = arith.mulf %118, %99 : vector<8x128xf32>
    %128 = arith.mulf %112, %120 : vector<8x128xf32>
    %129 = arith.addf %127, %128 : vector<8x128xf32>
    %130 = math.tanh %129 : vector<8x128xf32>
    %131 = arith.mulf %126, %130 : vector<8x128xf32>
    %c4_i32 = arith.constant 4 : i32
    %132 = arith.index_cast %c4_i32 : i32 to index
    %c0_37 = arith.constant 0 : index
    %c0_38 = arith.constant 0 : index
    %133 = vector.load %arg7[%132, %c0_37, %c0_38] : memref<8x8x512xf32, #tpu.memory_space<vmem>>, vector<1x8x512xf32>
    %134 = vector.shape_cast %133 : vector<1x8x512xf32> to vector<8x512xf32>
    %cst_39 = arith.constant dense<0.000000e+00> : vector<8x512xf32>
    %135 = tpu.matmul %131, %9, %cst_39 {dimension_numbers = #tpu.dot_dimension_numbers<[1], [0], [0], [1], [0, 0, 1, 1], [], []>} : vector<8x128xf32>, vector<128x512xf32>, vector<8x512xf32> -> vector<8x512xf32>
    %136 = arith.addf %134, %135 : vector<8x512xf32>
    %137 = vector.extract_strided_slice %136 {offsets = [0, 0], sizes = [8, 128], strides = [1, 1]} : vector<8x512xf32> to vector<8x128xf32>
    %138 = arith.negf %137 : vector<8x128xf32>
    %139 = math.exp %138 : vector<8x128xf32>
    %cst_40 = arith.constant 1.000000e+00 : f32
    %140 = vector.broadcast %cst_40 : f32 to vector<8x128xf32>
    %141 = arith.addf %140, %139 : vector<8x128xf32>
    %142 = arith.divf %140, %141 : vector<8x128xf32>
    %143 = vector.extract_strided_slice %136 {offsets = [0, 128], sizes = [8, 128], strides = [1, 1]} : vector<8x512xf32> to vector<8x128xf32>
    %144 = arith.negf %143 : vector<8x128xf32>
    %145 = math.exp %144 : vector<8x128xf32>
    %cst_41 = arith.constant 1.000000e+00 : f32
    %146 = vector.broadcast %cst_41 : f32 to vector<8x128xf32>
    %147 = arith.addf %146, %145 : vector<8x128xf32>
    %148 = arith.divf %146, %147 : vector<8x128xf32>
    %149 = vector.extract_strided_slice %136 {offsets = [0, 256], sizes = [8, 128], strides = [1, 1]} : vector<8x512xf32> to vector<8x128xf32>
    %150 = math.tanh %149 : vector<8x128xf32>
    %151 = vector.extract_strided_slice %136 {offsets = [0, 384], sizes = [8, 128], strides = [1, 1]} : vector<8x512xf32> to vector<8x128xf32>
    %152 = arith.negf %151 : vector<8x128xf32>
    %153 = math.exp %152 : vector<8x128xf32>
    %cst_42 = arith.constant 1.000000e+00 : f32
    %154 = vector.broadcast %cst_42 : f32 to vector<8x128xf32>
    %155 = arith.addf %154, %153 : vector<8x128xf32>
    %156 = arith.divf %154, %155 : vector<8x128xf32>
    %157 = arith.mulf %148, %129 : vector<8x128xf32>
    %158 = arith.mulf %142, %150 : vector<8x128xf32>
    %159 = arith.addf %157, %158 : vector<8x128xf32>
    %160 = math.tanh %159 : vector<8x128xf32>
    %161 = arith.mulf %156, %160 : vector<8x128xf32>
    %c5_i32 = arith.constant 5 : i32
    %162 = arith.index_cast %c5_i32 : i32 to index
    %c0_43 = arith.constant 0 : index
    %c0_44 = arith.constant 0 : index
    %163 = vector.load %arg7[%162, %c0_43, %c0_44] : memref<8x8x512xf32, #tpu.memory_space<vmem>>, vector<1x8x512xf32>
    %164 = vector.shape_cast %163 : vector<1x8x512xf32> to vector<8x512xf32>
    %cst_45 = arith.constant dense<0.000000e+00> : vector<8x512xf32>
    %165 = tpu.matmul %161, %9, %cst_45 {dimension_numbers = #tpu.dot_dimension_numbers<[1], [0], [0], [1], [0, 0, 1, 1], [], []>} : vector<8x128xf32>, vector<128x512xf32>, vector<8x512xf32> -> vector<8x512xf32>
    %166 = arith.addf %164, %165 : vector<8x512xf32>
    %167 = vector.extract_strided_slice %166 {offsets = [0, 0], sizes = [8, 128], strides = [1, 1]} : vector<8x512xf32> to vector<8x128xf32>
    %168 = arith.negf %167 : vector<8x128xf32>
    %169 = math.exp %168 : vector<8x128xf32>
    %cst_46 = arith.constant 1.000000e+00 : f32
    %170 = vector.broadcast %cst_46 : f32 to vector<8x128xf32>
    %171 = arith.addf %170, %169 : vector<8x128xf32>
    %172 = arith.divf %170, %171 : vector<8x128xf32>
    %173 = vector.extract_strided_slice %166 {offsets = [0, 128], sizes = [8, 128], strides = [1, 1]} : vector<8x512xf32> to vector<8x128xf32>
    %174 = arith.negf %173 : vector<8x128xf32>
    %175 = math.exp %174 : vector<8x128xf32>
    %cst_47 = arith.constant 1.000000e+00 : f32
    %176 = vector.broadcast %cst_47 : f32 to vector<8x128xf32>
    %177 = arith.addf %176, %175 : vector<8x128xf32>
    %178 = arith.divf %176, %177 : vector<8x128xf32>
    %179 = vector.extract_strided_slice %166 {offsets = [0, 256], sizes = [8, 128], strides = [1, 1]} : vector<8x512xf32> to vector<8x128xf32>
    %180 = math.tanh %179 : vector<8x128xf32>
    %181 = vector.extract_strided_slice %166 {offsets = [0, 384], sizes = [8, 128], strides = [1, 1]} : vector<8x512xf32> to vector<8x128xf32>
    %182 = arith.negf %181 : vector<8x128xf32>
    %183 = math.exp %182 : vector<8x128xf32>
    %cst_48 = arith.constant 1.000000e+00 : f32
    %184 = vector.broadcast %cst_48 : f32 to vector<8x128xf32>
    %185 = arith.addf %184, %183 : vector<8x128xf32>
    %186 = arith.divf %184, %185 : vector<8x128xf32>
    %187 = arith.mulf %178, %159 : vector<8x128xf32>
    %188 = arith.mulf %172, %180 : vector<8x128xf32>
    %189 = arith.addf %187, %188 : vector<8x128xf32>
    %190 = math.tanh %189 : vector<8x128xf32>
    %191 = arith.mulf %186, %190 : vector<8x128xf32>
    %c6_i32 = arith.constant 6 : i32
    %192 = arith.index_cast %c6_i32 : i32 to index
    %c0_49 = arith.constant 0 : index
    %c0_50 = arith.constant 0 : index
    %193 = vector.load %arg7[%192, %c0_49, %c0_50] : memref<8x8x512xf32, #tpu.memory_space<vmem>>, vector<1x8x512xf32>
    %194 = vector.shape_cast %193 : vector<1x8x512xf32> to vector<8x512xf32>
    %cst_51 = arith.constant dense<0.000000e+00> : vector<8x512xf32>
    %195 = tpu.matmul %191, %9, %cst_51 {dimension_numbers = #tpu.dot_dimension_numbers<[1], [0], [0], [1], [0, 0, 1, 1], [], []>} : vector<8x128xf32>, vector<128x512xf32>, vector<8x512xf32> -> vector<8x512xf32>
    %196 = arith.addf %194, %195 : vector<8x512xf32>
    %197 = vector.extract_strided_slice %196 {offsets = [0, 0], sizes = [8, 128], strides = [1, 1]} : vector<8x512xf32> to vector<8x128xf32>
    %198 = arith.negf %197 : vector<8x128xf32>
    %199 = math.exp %198 : vector<8x128xf32>
    %cst_52 = arith.constant 1.000000e+00 : f32
    %200 = vector.broadcast %cst_52 : f32 to vector<8x128xf32>
    %201 = arith.addf %200, %199 : vector<8x128xf32>
    %202 = arith.divf %200, %201 : vector<8x128xf32>
    %203 = vector.extract_strided_slice %196 {offsets = [0, 128], sizes = [8, 128], strides = [1, 1]} : vector<8x512xf32> to vector<8x128xf32>
    %204 = arith.negf %203 : vector<8x128xf32>
    %205 = math.exp %204 : vector<8x128xf32>
    %cst_53 = arith.constant 1.000000e+00 : f32
    %206 = vector.broadcast %cst_53 : f32 to vector<8x128xf32>
    %207 = arith.addf %206, %205 : vector<8x128xf32>
    %208 = arith.divf %206, %207 : vector<8x128xf32>
    %209 = vector.extract_strided_slice %196 {offsets = [0, 256], sizes = [8, 128], strides = [1, 1]} : vector<8x512xf32> to vector<8x128xf32>
    %210 = math.tanh %209 : vector<8x128xf32>
    %211 = vector.extract_strided_slice %196 {offsets = [0, 384], sizes = [8, 128], strides = [1, 1]} : vector<8x512xf32> to vector<8x128xf32>
    %212 = arith.negf %211 : vector<8x128xf32>
    %213 = math.exp %212 : vector<8x128xf32>
    %cst_54 = arith.constant 1.000000e+00 : f32
    %214 = vector.broadcast %cst_54 : f32 to vector<8x128xf32>
    %215 = arith.addf %214, %213 : vector<8x128xf32>
    %216 = arith.divf %214, %215 : vector<8x128xf32>
    %217 = arith.mulf %208, %189 : vector<8x128xf32>
    %218 = arith.mulf %202, %210 : vector<8x128xf32>
    %219 = arith.addf %217, %218 : vector<8x128xf32>
    %220 = math.tanh %219 : vector<8x128xf32>
    %221 = arith.mulf %216, %220 : vector<8x128xf32>
    %c7_i32 = arith.constant 7 : i32
    %222 = arith.index_cast %c7_i32 : i32 to index
    %c0_55 = arith.constant 0 : index
    %c0_56 = arith.constant 0 : index
    %223 = vector.load %arg7[%222, %c0_55, %c0_56] : memref<8x8x512xf32, #tpu.memory_space<vmem>>, vector<1x8x512xf32>
    %224 = vector.shape_cast %223 : vector<1x8x512xf32> to vector<8x512xf32>
    %cst_57 = arith.constant dense<0.000000e+00> : vector<8x512xf32>
    %225 = tpu.matmul %221, %9, %cst_57 {dimension_numbers = #tpu.dot_dimension_numbers<[1], [0], [0], [1], [0, 0, 1, 1], [], []>} : vector<8x128xf32>, vector<128x512xf32>, vector<8x512xf32> -> vector<8x512xf32>
    %226 = arith.addf %224, %225 : vector<8x512xf32>
    %227 = vector.extract_strided_slice %226 {offsets = [0, 0], sizes = [8, 128], strides = [1, 1]} : vector<8x512xf32> to vector<8x128xf32>
    %228 = arith.negf %227 : vector<8x128xf32>
    %229 = math.exp %228 : vector<8x128xf32>
    %cst_58 = arith.constant 1.000000e+00 : f32
    %230 = vector.broadcast %cst_58 : f32 to vector<8x128xf32>
    %231 = arith.addf %230, %229 : vector<8x128xf32>
    %232 = arith.divf %230, %231 : vector<8x128xf32>
    %233 = vector.extract_strided_slice %226 {offsets = [0, 128], sizes = [8, 128], strides = [1, 1]} : vector<8x512xf32> to vector<8x128xf32>
    %234 = arith.negf %233 : vector<8x128xf32>
    %235 = math.exp %234 : vector<8x128xf32>
    %cst_59 = arith.constant 1.000000e+00 : f32
    %236 = vector.broadcast %cst_59 : f32 to vector<8x128xf32>
    %237 = arith.addf %236, %235 : vector<8x128xf32>
    %238 = arith.divf %236, %237 : vector<8x128xf32>
    %239 = vector.extract_strided_slice %226 {offsets = [0, 256], sizes = [8, 128], strides = [1, 1]} : vector<8x512xf32> to vector<8x128xf32>
    %240 = math.tanh %239 : vector<8x128xf32>
    %241 = vector.extract_strided_slice %226 {offsets = [0, 384], sizes = [8, 128], strides = [1, 1]} : vector<8x512xf32> to vector<8x128xf32>
    %242 = arith.negf %241 : vector<8x128xf32>
    %243 = math.exp %242 : vector<8x128xf32>
    %cst_60 = arith.constant 1.000000e+00 : f32
    %244 = vector.broadcast %cst_60 : f32 to vector<8x128xf32>
    %245 = arith.addf %244, %243 : vector<8x128xf32>
    %246 = arith.divf %244, %245 : vector<8x128xf32>
    %247 = arith.mulf %238, %219 : vector<8x128xf32>
    %248 = arith.mulf %232, %240 : vector<8x128xf32>
    %249 = arith.addf %247, %248 : vector<8x128xf32>
    %250 = math.tanh %249 : vector<8x128xf32>
    %251 = arith.mulf %246, %250 : vector<8x128xf32>
    %c8_i32 = arith.constant 8 : i32
    %c0_61 = arith.constant 0 : index
    %c0_62 = arith.constant 0 : index
    %252 = vector.load %arg4[%c0_61, %c0_62] : memref<128x128xf32, #tpu.memory_space<vmem>>, vector<128x128xf32>
    %cst_63 = arith.constant dense<0.000000e+00> : vector<8x128xf32>
    %253 = tpu.matmul %251, %252, %cst_63 {dimension_numbers = #tpu.dot_dimension_numbers<[1], [0], [0], [1], [0, 0, 1, 1], [], []>} : vector<8x128xf32>, vector<128x128xf32>, vector<8x128xf32> -> vector<8x128xf32>
    %c0_64 = arith.constant 0 : index
    %c0_65 = arith.constant 0 : index
    %254 = vector.load %arg5[%c0_64, %c0_65] : memref<1x128xf32, #tpu.memory_space<vmem>>, vector<1x128xf32>
    %255 = vector.broadcast %254 : vector<1x128xf32> to vector<8x128xf32>
    %256 = arith.addf %253, %255 : vector<8x128xf32>
    %c0_66 = arith.constant 0 : index
    %c0_67 = arith.constant 0 : index
    %257 = vector.load %arg6[%c0_66, %c0_67] : memref<8x128xf32, #tpu.memory_space<vmem>>, vector<8x128xf32>
    tpu.vector_store %arg6[%c0_66, %c0_67], %256 {strides = array<i32>} : memref<8x128xf32, #tpu.memory_space<vmem>>, vector<8x128xf32>,
    return
  }
}

</mosaic_0001>

<llo_original>
// kernel: tpu_custom_call.1
$region0: #{tpu_custom_call.1}
  #allocation0 [shape = 'u32[]', space=smem, size = 0x4, offset = 0x4, fixed_abs, tag = 'smem constant byte address 0x4 - core index']
  #allocation1 [shape = 'u32[144,128]{1,0:T(1,128)}', space=vmem, size = 0x12000, scoped, tag = 'internal scratch']
  #allocation2 [shape = 'f32[8,8,512]{2,1,0:T(8,128)}', space=vmem, size = 0x20000, scoped, tag = 'scratch operand']
  %s0 = inlined_call_operand.hbm [shape: f32[8,8,128], index: 0, kind: input, shape index: {}]
  %s1 = inlined_call_operand.hbm [shape: f32[128,512], index: 1, kind: input, shape index: {}]
  %s2 = inlined_call_operand.hbm [shape: f32[128,512], index: 2, kind: input, shape index: {}]
  %s3 = inlined_call_operand.vmem [shape: f32[1,512], index: 3, kind: input, shape index: {}]
  %s4 = inlined_call_operand.hbm [shape: f32[128,128], index: 4, kind: input, shape index: {}]
  %s5 = inlined_call_operand.vmem [shape: f32[1,128], index: 5, kind: input, shape index: {}]
  %s6 = inlined_call_operand.hbm [shape: f32[8,128], index: 6, kind: output, shape index: {}]
  %s7 = sld [smem:[#allocation0]]
  $region50: #{tpu_custom_call.1} parent=0
    _
  %s9 = ssub.s32 1, %s7
  %s10 = scalar_select 0, %s9, %s7
  $region1: #{tpu_custom_call.1} parent=0
    #allocation3 [shape = 'u8[32768]{0}', space=vmem, size = 0x8000, scoped, tag = 'input window, operand 0, single buffered']
    #allocation4 [shape = 's32[1]{0}', space=sflag, size = 0x4, scoped, tag = 'scoped memory for tpu_custom_call.1']
    #allocation5 [shape = 's32[1]{0}', space=sflag, size = 0x4, scoped, tag = 'scoped memory for tpu_custom_call.1']
    #allocation6 [shape = 'u8[262144]{0}', space=vmem, size = 0x40000, scoped, tag = 'input window, operand 1, single buffered']
    #allocation7 [shape = 's32[1]{0}', space=sflag, size = 0x4, scoped, tag = 'scoped memory for tpu_custom_call.1']
    #allocation8 [shape = 'u8[262144]{0}', space=vmem, size = 0x40000, scoped, tag = 'input window, operand 2, single buffered']
    #allocation9 [shape = 'u8[65536]{0}', space=vmem, size = 0x10000, scoped, tag = 'input window, operand 4, single buffered']
    #allocation10 [shape = 's32[1]{0}', space=sflag, size = 0x4, scoped, tag = 'scoped memory for tpu_custom_call.1']
    #allocation11 [shape = 'u8[4096]{0}', space=vmem, size = 0x1000, scoped, tag = 'output window, operand 0, single buffered']
    %11 = vsyncpa [#allocation4], 0
    %12 = vsyncpa [#allocation7], 0
    %13 = vsyncpa [#allocation10], 0
    %14 = vsyncpa [#allocation5], 0
    // Predicated region
    $region2: #{tpu_custom_call.1} parent=1 // pred_check
      _
    $region3: #{tpu_custom_call.1} parent=1 // pred_check_branch
      %16 = sbr.rel (0) target = $region5
    $region4: #{tpu_custom_call.1} parent=1 // pred_region
      %s18 = ssub.s32 1024, 1024
      %19 = vsyncadd [#allocation4], %s18
      %s20 = sshll.u32 [#allocation3], 4
      %s21 = int_to_ptr.vmem [resolvable:$true] %s20
      %26 = dma.hbm_to_vmem [thread:$0]  %s0, 1024, %s21, [#allocation4], 128, 128, 8
    $region5: #{tpu_custom_call.1} parent=1 // pred_fallthru
      _
    // Predicated region
    $region6: #{tpu_custom_call.1} parent=1 // pred_check
      _
    $region7: #{tpu_custom_call.1} parent=1 // pred_check_branch
      %28 = sbr.rel (0) target = $region9
    $region8: #{tpu_custom_call.1} parent=1 // pred_region
      %s30 = ssub.s32 8192, 8192
      %31 = vsyncadd [#allocation7], %s30
      %s32 = sshll.u32 [#allocation6], 4
      %s33 = int_to_ptr.vmem [resolvable:$true] %s32
      %38 = dma.hbm_to_vmem [thread:$0]  %s1, 8192, %s33, [#allocation7], 512, 512, 32
    $region9: #{tpu_custom_call.1} parent=1 // pred_fallthru
      _
    // Predicated region
    $region10: #{tpu_custom_call.1} parent=1 // pred_check
      _
    $region11: #{tpu_custom_call.1} parent=1 // pred_check_branch
      %40 = sbr.rel (0) target = $region13
    $region12: #{tpu_custom_call.1} parent=1 // pred_region
      %s42 = ssub.s32 8192, 8192
      %43 = vsyncadd [#allocation7], %s42
      %s44 = sshll.u32 [#allocation8], 4
      %s45 = int_to_ptr.vmem [resolvable:$true] %s44
      %50 = dma.hbm_to_vmem [thread:$0]  %s2, 8192, %s45, [#allocation7], 512, 512, 32
    $region13: #{tpu_custom_call.1} parent=1 // pred_fallthru
      _
    // Predicated region
    $region14: #{tpu_custom_call.1} parent=1 // pred_check
      _
    $region15: #{tpu_custom_call.1} parent=1 // pred_check_branch
      %52 = sbr.rel (0) target = $region17
    $region16: #{tpu_custom_call.1} parent=1 // pred_region
      _
    $region17: #{tpu_custom_call.1} parent=1 // pred_fallthru
      _
    // Predicated region
    $region18: #{tpu_custom_call.1} parent=1 // pred_check
      _
    $region19: #{tpu_custom_call.1} parent=1 // pred_check_branch
      %54 = sbr.rel (0) target = $region21
    $region20: #{tpu_custom_call.1} parent=1 // pred_region
      %s56 = ssub.s32 2048, 2048
      %57 = vsyncadd [#allocation10], %s56
      %s58 = sshll.u32 [#allocation9], 4
      %s59 = int_to_ptr.vmem [resolvable:$true] %s58
      %64 = dma.hbm_to_vmem [thread:$0]  %s4, 2048, %s59, [#allocation10], 128, 128, 8
    $region21: #{tpu_custom_call.1} parent=1 // pred_fallthru
      _
    // Predicated region
    $region22: #{tpu_custom_call.1} parent=1 // pred_check
      _
    $region23: #{tpu_custom_call.1} parent=1 // pred_check_branch
      %66 = sbr.rel (0) target = $region25
    $region24: #{tpu_custom_call.1} parent=1 // pred_region
      _
    $region25: #{tpu_custom_call.1} parent=1 // pred_fallthru
      _
    // Predicated region
    $region26: #{tpu_custom_call.1} parent=1 // pred_check
      _
    $region27: #{tpu_custom_call.1} parent=1 // pred_check_branch
      %68 = sbr.rel (0) target = $region29
    $region28: #{tpu_custom_call.1} parent=1 // pred_region
      %69 = dma.done [#allocation4], 1024
    $region29: #{tpu_custom_call.1} parent=1 // pred_fallthru
      _
    // Predicated region
    $region30: #{tpu_custom_call.1} parent=1 // pred_check
      _
    $region31: #{tpu_custom_call.1} parent=1 // pred_check_branch
      %71 = sbr.rel (0) target = $region33
    $region32: #{tpu_custom_call.1} parent=1 // pred_region
      %72 = dma.done [#allocation7], 8192
    $region33: #{tpu_custom_call.1} parent=1 // pred_fallthru
      _
    // Predicated region
    $region34: #{tpu_custom_call.1} parent=1 // pred_check
      _
    $region35: #{tpu_custom_call.1} parent=1 // pred_check_branch
      %74 = sbr.rel (0) target = $region37
    $region36: #{tpu_custom_call.1} parent=1 // pred_region
      %75 = dma.done [#allocation7], 8192
    $region37: #{tpu_custom_call.1} parent=1 // pred_fallthru
      _
    // Predicated region
    $region38: #{tpu_custom_call.1} parent=1 // pred_check
      _
    $region39: #{tpu_custom_call.1} parent=1 // pred_check_branch
      %77 = sbr.rel (0) target = $region41
    $region40: #{tpu_custom_call.1} parent=1 // pred_region
      %78 = dma.done [#allocation10], 2048
    $region41: #{tpu_custom_call.1} parent=1 // pred_fallthru
      _
    %v79 = vld [vmem:[#allocation3] sm:$0xff]
    %v80 = vld [vmem:[#allocation3 + $0x8] sm:$0xff]
    %v81 = vld [vmem:[#allocation3 + $0x10] sm:$0xff]
    %v82 = vld [vmem:[#allocation3 + $0x18] sm:$0xff]
    %v83 = vld [vmem:[#allocation3 + $0x20] sm:$0xff]
    %v84 = vld [vmem:[#allocation3 + $0x28] sm:$0xff]
    %v85 = vld [vmem:[#allocation3 + $0x30] sm:$0xff]
    %v86 = vld [vmem:[#allocation3 + $0x38] sm:$0xff]
    %v87 = vld [vmem:[#allocation6] sm:$0xff]
    %v88 = vld [vmem:[#allocation6 + $0x8] sm:$0xff]
    %v89 = vld [vmem:[#allocation6 + $0x10] sm:$0xff]
    %v90 = vld [vmem:[#allocation6 + $0x18] sm:$0xff]
    %v91 = vld [vmem:[#allocation6 + $0x20] sm:$0xff]
    %v92 = vld [vmem:[#allocation6 + $0x28] sm:$0xff]
    %v93 = vld [vmem:[#allocation6 + $0x30] sm:$0xff]
    %v94 = vld [vmem:[#allocation6 + $0x38] sm:$0xff]
    %v95 = vld [vmem:[#allocation6 + $0x40] sm:$0xff]
    %v96 = vld [vmem:[#allocation6 + $0x48] sm:$0xff]
    %v97 = vld [vmem:[#allocation6 + $0x50] sm:$0xff]
    %v98 = vld [vmem:[#allocation6 + $0x58] sm:$0xff]
    %v99 = vld [vmem:[#allocation6 + $0x60] sm:$0xff]
    %v100 = vld [vmem:[#allocation6 + $0x68] sm:$0xff]
    %v101 = vld [vmem:[#allocation6 + $0x70] sm:$0xff]
    %v102 = vld [vmem:[#allocation6 + $0x78] sm:$0xff]
    %v103 = vld [vmem:[#allocation6 + $0x80] sm:$0xff]
    %v104 = vld [vmem:[#allocation6 + $0x88] sm:$0xff]
    %v105 = vld [vmem:[#allocation6 + $0x90] sm:$0xff]
    %v106 = vld [vmem:[#allocation6 + $0x98] sm:$0xff]
    %v107 = vld [vmem:[#allocation6 + $0xa0] sm:$0xff]
    %v108 = vld [vmem:[#allocation6 + $0xa8] sm:$0xff]
    %v109 = vld [vmem:[#allocation6 + $0xb0] sm:$0xff]
    %v110 = vld [vmem:[#allocation6 + $0xb8] sm:$0xff]
    %v111 = vld [vmem:[#allocation6 + $0xc0] sm:$0xff]
    %v112 = vld [vmem:[#allocation6 + $0xc8] sm:$0xff]
    %v113 = vld [vmem:[#allocation6 + $0xd0] sm:$0xff]
    %v114 = vld [vmem:[#allocation6 + $0xd8] sm:$0xff]
    %v115 = vld [vmem:[#allocation6 + $0xe0] sm:$0xff]
    %v116 = vld [vmem:[#allocation6 + $0xe8] sm:$0xff]
    %v117 = vld [vmem:[#allocation6 + $0xf0] sm:$0xff]
    %v118 = vld [vmem:[#allocation6 + $0xf8] sm:$0xff]
    %v119 = vld [vmem:[#allocation6 + $0x100] sm:$0xff]
    %v120 = vld [vmem:[#allocation6 + $0x108] sm:$0xff]
    %v121 = vld [vmem:[#allocation6 + $0x110] sm:$0xff]
    %v122 = vld [vmem:[#allocation6 + $0x118] sm:$0xff]
    %v123 = vld [vmem:[#allocation6 + $0x120] sm:$0xff]
    %v124 = vld [vmem:[#allocation6 + $0x128] sm:$0xff]
    %v125 = vld [vmem:[#allocation6 + $0x130] sm:$0xff]
    %v126 = vld [vmem:[#allocation6 + $0x138] sm:$0xff]
    %v127 = vld [vmem:[#allocation6 + $0x140] sm:$0xff]
    %v128 = vld [vmem:[#allocation6 + $0x148] sm:$0xff]
    %v129 = vld [vmem:[#allocation6 + $0x150] sm:$0xff]
    %v130 = vld [vmem:[#allocation6 + $0x158] sm:$0xff]
    %v131 = vld [vmem:[#allocation6 + $0x160] sm:$0xff]
    %v132 = vld [vmem:[#allocation6 + $0x168] sm:$0xff]
    %v133 = vld [vmem:[#allocation6 + $0x170] sm:$0xff]
    %v134 = vld [vmem:[#allocation6 + $0x178] sm:$0xff]
    %v135 = vld [vmem:[#allocation6 + $0x180] sm:$0xff]
    %v136 = vld [vmem:[#allocation6 + $0x188] sm:$0xff]
    %v137 = vld [vmem:[#allocation6 + $0x190] sm:$0xff]
    %v138 = vld [vmem:[#allocation6 + $0x198] sm:$0xff]
    %v139 = vld [vmem:[#allocation6 + $0x1a0] sm:$0xff]
    %v140 = vld [vmem:[#allocation6 + $0x1a8] sm:$0xff]
    %v141 = vld [vmem:[#allocation6 + $0x1b0] sm:$0xff]
    %v142 = vld [vmem:[#allocation6 + $0x1b8] sm:$0xff]
    %v143 = vld [vmem:[#allocation6 + $0x1c0] sm:$0xff]
    %v144 = vld [vmem:[#allocation6 + $0x1c8] sm:$0xff]
    %v145 = vld [vmem:[#allocation6 + $0x1d0] sm:$0xff]
    %v146 = vld [vmem:[#allocation6 + $0x1d8] sm:$0xff]
    %v147 = vld [vmem:[#allocation6 + $0x1e0] sm:$0xff]
    %v148 = vld [vmem:[#allocation6 + $0x1e8] sm:$0xff]
    %v149 = vld [vmem:[#allocation6 + $0x1f0] sm:$0xff]
    %v150 = vld [vmem:[#allocation6 + $0x1f8] sm:$0xff]
    %v151 = vld [vmem:[%s3] sm:$0xf]
    %v153 = vlaneseq
    %v154 = vshrl.u32 %v153, 7
    %v155 = vsub.s32 0, %v154
    %v156 = vrot.slane %v151, %v155
    %v157 = vlaneseq
    %v158 = vshrl.u32 %v157, 7
    %v159 = vsub.s32 1, %v158
    %v160 = vrot.slane %v151, %v159
    %v161 = vlaneseq
    %v162 = vshrl.u32 %v161, 7
    %v163 = vsub.s32 2, %v162
    %v164 = vrot.slane %v151, %v163
    %v165 = vlaneseq
    %v166 = vshrl.u32 %v165, 7
    %v167 = vsub.s32 3, %v166
    %v168 = vrot.slane %v151, %v167
    %173 = vmatprep.subr.mxu0 %v88
    %174 = vmatpush1.msra.mxu0 %v87
    %175 = vmatprep.subr.mxu0 %v92
    %176 = vmatpush1.msra.mxu0 %v91
    %177 = vmatprep.subr.mxu0 %v96
    %178 = vmatpush1.msra.mxu0 %v95
    %179 = vmatprep.subr.mxu0 %v100
    %180 = vmatpush1.msra.mxu0 %v99
    %181 = vmatprep.subr.mxu0 %v104
    %182 = vmatpush1.msra.mxu0 %v103
    %183 = vmatprep.subr.mxu0 %v108
    %184 = vmatpush1.msra.mxu0 %v107
    %185 = vmatprep.subr.mxu0 %v112
    %186 = vmatpush1.msra.mxu0 %v111
    %187 = vmatprep.subr.mxu0 %v116
    %188 = vmatpush1.msra.mxu0 %v115
    %189 = vmatprep.subr.mxu0 %v120
    %190 = vmatpush1.msra.mxu0 %v119
    %191 = vmatprep.subr.mxu0 %v124
    %192 = vmatpush1.msra.mxu0 %v123
    %193 = vmatprep.subr.mxu0 %v128
    %194 = vmatpush1.msra.mxu0 %v127
    %195 = vmatprep.subr.mxu0 %v132
    %196 = vmatpush1.msra.mxu0 %v131
    %197 = vmatprep.subr.mxu0 %v136
    %198 = vmatpush1.msra.mxu0 %v135
    %199 = vmatprep.subr.mxu0 %v140
    %200 = vmatpush1.msra.mxu0 %v139
    %201 = vmatprep.subr.mxu0 %v144
    %202 = vmatpush1.msra.mxu0 %v143
    %203 = vmatprep.subr.mxu0 %v148
    %204 = vmatpush1.msra.mxu0 %v147
    %205 = vmatprep.subr.mxu0 0.0
    %206 = vmatpush1.msra.mxu0 0.0
    %207 = vmatprep.subr.mxu0 0.0
    %208 = vmatpush1.msra.mxu0 0.0
    %209 = vmatprep.subr.mxu0 0.0
    %210 = vmatpush1.msra.mxu0 0.0
    %211 = vmatprep.subr.mxu0 0.0
    %212 = vmatpush1.msra.mxu0 0.0
    %213 = vmatprep.subr.mxu0 0.0
    %214 = vmatpush1.msra.mxu0 0.0
    %215 = vmatprep.subr.mxu0 0.0
    %216 = vmatpush1.msra.mxu0 0.0
    %217 = vmatprep.subr.mxu0 0.0
    %218 = vmatpush1.msra.mxu0 0.0
    %219 = vmatprep.subr.mxu0 0.0
    %220 = vmatpush1.msra.mxu0 0.0
    %221 = vmatprep.subr.mxu0 0.0
    %222 = vmatpush1.msra.mxu0 0.0
    %223 = vmatprep.subr.mxu0 0.0
    %224 = vmatpush1.msra.mxu0 0.0
    %225 = vmatprep.subr.mxu0 0.0
    %226 = vmatpush1.msra.mxu0 0.0
    %227 = vmatprep.subr.mxu0 0.0
    %228 = vmatpush1.msra.mxu0 0.0
    %229 = vmatprep.subr.mxu0 0.0
    %230 = vmatpush1.msra.mxu0 0.0
    %231 = vmatprep.subr.mxu0 0.0
    %232 = vmatpush1.msra.mxu0 0.0
    %233 = vmatprep.subr.mxu0 0.0
    %234 = vmatpush1.msra.mxu0 0.0
    %235 = vmatprep.subr.mxu0 0.0
    %236 = vmatpush1.msra.mxu0 0.0
    %237 = vmatprep.mubr.f32.mxu0 0.0
    %238 = vmatmul.mubr.f32.gmra.mrb[0].mxu0 %v79
    %v239 = vpop.f32.mrb[0].mxu0
    %v240 = vadd.f32 %v156, %v239
    %v241 = vpop.f32.mrb[0].mxu0
    %v242 = vadd.f32 %v160, %v241
    %243 = vmatprep.mubr.f32.mxu0 0.0
    %244 = vmatmul.mubr.f32.gmra.mrb[0].mxu0 %v80
    %v245 = vpop.f32.mrb[0].mxu0
    %v246 = vadd.f32 %v156, %v245
    %v247 = vpop.f32.mrb[0].mxu0
    %v248 = vadd.f32 %v160, %v247
    %249 = vmatprep.mubr.f32.mxu0 0.0
    %250 = vmatmul.mubr.f32.gmra.mrb[0].mxu0 %v81
    %v251 = vpop.f32.mrb[0].mxu0
    %v252 = vadd.f32 %v156, %v251
    %v253 = vpop.f32.mrb[0].mxu0
    %v254 = vadd.f32 %v160, %v253
    %255 = vmatprep.mubr.f32.mxu0 0.0
    %256 = vmatmul.mubr.f32.gmra.mrb[0].mxu0 %v82
    %v257 = vpop.f32.mrb[0].mxu0
    %v258 = vadd.f32 %v156, %v257
    %v259 = vpop.f32.mrb[0].mxu0
    %v260 = vadd.f32 %v160, %v259
    %261 = vmatprep.mubr.f32.mxu0 0.0
    %262 = vmatmul.mubr.f32.gmra.mrb[0].mxu0 %v83
    %v263 = vpop.f32.mrb[0].mxu0
    %v264 = vadd.f32 %v156, %v263
    %v265 = vpop.f32.mrb[0].mxu0
    %v266 = vadd.f32 %v160, %v265
    %267 = vmatprep.mubr.f32.mxu0 0.0
    %268 = vmatmul.mubr.f32.gmra.mrb[0].mxu0 %v84
    %v269 = vpop.f32.mrb[0].mxu0
    %v270 = vadd.f32 %v156, %v269
    %v271 = vpop.f32.mrb[0].mxu0
    %v272 = vadd.f32 %v160, %v271
    %273 = vmatprep.mubr.f32.mxu0 0.0
    %274 = vmatmul.mubr.f32.gmra.mrb[0].mxu0 %v85
    %v275 = vpop.f32.mrb[0].mxu0
    %v276 = vadd.f32 %v156, %v275
    %v277 = vpop.f32.mrb[0].mxu0
    %v278 = vadd.f32 %v160, %v277
    %279 = vmatprep.mubr.f32.mxu0 0.0
    %280 = vmatmul.mubr.f32.gmra.mrb[0].mxu0 %v86
    %v281 = vpop.f32.mrb[0].mxu0
    %v282 = vadd.f32 %v156, %v281
    %v283 = vpop.f32.mrb[0].mxu0
    %v284 = vadd.f32 %v160, %v283
    %285 = vdwg.mxu0
    %286 = vmatprep.subr.mxu0 %v90
    %287 = vmatpush1.msra.mxu0 %v89
    %288 = vmatprep.subr.mxu0 %v94
    %289 = vmatpush1.msra.mxu0 %v93
    %290 = vmatprep.subr.mxu0 %v98
    %291 = vmatpush1.msra.mxu0 %v97
    %292 = vmatprep.subr.mxu0 %v102
    %293 = vmatpush1.msra.mxu0 %v101
    %294 = vmatprep.subr.mxu0 %v106
    %295 = vmatpush1.msra.mxu0 %v105
    %296 = vmatprep.subr.mxu0 %v110
    %297 = vmatpush1.msra.mxu0 %v109
    %298 = vmatprep.subr.mxu0 %v114
    %299 = vmatpush1.msra.mxu0 %v113
    %300 = vmatprep.subr.mxu0 %v118
    %301 = vmatpush1.msra.mxu0 %v117
    %302 = vmatprep.subr.mxu0 %v122
    %303 = vmatpush1.msra.mxu0 %v121
    %304 = vmatprep.subr.mxu0 %v126
    %305 = vmatpush1.msra.mxu0 %v125
    %306 = vmatprep.subr.mxu0 %v130
    %307 = vmatpush1.msra.mxu0 %v129
    %308 = vmatprep.subr.mxu0 %v134
    %309 = vmatpush1.msra.mxu0 %v133
    %310 = vmatprep.subr.mxu0 %v138
    %311 = vmatpush1.msra.mxu0 %v137
    %312 = vmatprep.subr.mxu0 %v142
    %313 = vmatpush1.msra.mxu0 %v141
    %314 = vmatprep.subr.mxu0 %v146
    %315 = vmatpush1.msra.mxu0 %v145
    %316 = vmatprep.subr.mxu0 %v150
    %317 = vmatpush1.msra.mxu0 %v149
    %318 = vmatprep.subr.mxu0 0.0
    %319 = vmatpush1.msra.mxu0 0.0
    %320 = vmatprep.subr.mxu0 0.0
    %321 = vmatpush1.msra.mxu0 0.0
    %322 = vmatprep.subr.mxu0 0.0
    %323 = vmatpush1.msra.mxu0 0.0
    %324 = vmatprep.subr.mxu0 0.0
    %325 = vmatpush1.msra.mxu0 0.0
    %326 = vmatprep.subr.mxu0 0.0
    %327 = vmatpush1.msra.mxu0 0.0
    %328 = vmatprep.subr.mxu0 0.0
    %329 = vmatpush1.msra.mxu0 0.0
    %330 = vmatprep.subr.mxu0 0.0
    %331 = vmatpush1.msra.mxu0 0.0
    %332 = vmatprep.subr.mxu0 0.0
    %333 = vmatpush1.msra.mxu0 0.0
    %334 = vmatprep.subr.mxu0 0.0
    %335 = vmatpush1.msra.mxu0 0.0
    %336 = vmatprep.subr.mxu0 0.0
    %337 = vmatpush1.msra.mxu0 0.0
    %338 = vmatprep.subr.mxu0 0.0
    %339 = vmatpush1.msra.mxu0 0.0
    %340 = vmatprep.subr.mxu0 0.0
    %341 = vmatpush1.msra.mxu0 0.0
    %342 = vmatprep.subr.mxu0 0.0
    %343 = vmatpush1.msra.mxu0 0.0
    %344 = vmatprep.subr.mxu0 0.0
    %345 = vmatpush1.msra.mxu0 0.0
    %346 = vmatprep.subr.mxu0 0.0
    %347 = vmatpush1.msra.mxu0 0.0
    %348 = vmatprep.subr.mxu0 0.0
    %349 = vmatpush1.msra.mxu0 0.0
    %350 = vmatprep.mubr.f32.mxu0 0.0
    %351 = vmatmul.mubr.f32.gmra.mrb[0].mxu0 %v79
    %v352 = vpop.f32.mrb[0].mxu0
    %v353 = vadd.f32 %v164, %v352
    %v354 = vpop.f32.mrb[0].mxu0
    %v355 = vadd.f32 %v168, %v354
    %356 = vmatprep.mubr.f32.mxu0 0.0
    %357 = vmatmul.mubr.f32.gmra.mrb[0].mxu0 %v80
    %v358 = vpop.f32.mrb[0].mxu0
    %v359 = vadd.f32 %v164, %v358
    %v360 = vpop.f32.mrb[0].mxu0
    %v361 = vadd.f32 %v168, %v360
    %362 = vmatprep.mubr.f32.mxu0 0.0
    %363 = vmatmul.mubr.f32.gmra.mrb[0].mxu0 %v81
    %v364 = vpop.f32.mrb[0].mxu0
    %v365 = vadd.f32 %v164, %v364
    %v366 = vpop.f32.mrb[0].mxu0
    %v367 = vadd.f32 %v168, %v366
    %368 = vmatprep.mubr.f32.mxu0 0.0
    %369 = vmatmul.mubr.f32.gmra.mrb[0].mxu0 %v82
    %v370 = vpop.f32.mrb[0].mxu0
    %v371 = vadd.f32 %v164, %v370
    %v372 = vpop.f32.mrb[0].mxu0
    %v373 = vadd.f32 %v168, %v372
    %374 = vmatprep.mubr.f32.mxu0 0.0
    %375 = vmatmul.mubr.f32.gmra.mrb[0].mxu0 %v83
    %v376 = vpop.f32.mrb[0].mxu0
    %v377 = vadd.f32 %v164, %v376
    %v378 = vpop.f32.mrb[0].mxu0
    %v379 = vadd.f32 %v168, %v378
    %380 = vmatprep.mubr.f32.mxu0 0.0
    %381 = vmatmul.mubr.f32.gmra.mrb[0].mxu0 %v84
    %v382 = vpop.f32.mrb[0].mxu0
    %v383 = vadd.f32 %v164, %v382
    %v384 = vpop.f32.mrb[0].mxu0
    %v385 = vadd.f32 %v168, %v384
    %386 = vmatprep.mubr.f32.mxu0 0.0
    %387 = vmatmul.mubr.f32.gmra.mrb[0].mxu0 %v85
    %v388 = vpop.f32.mrb[0].mxu0
    %v389 = vadd.f32 %v164, %v388
    %v390 = vpop.f32.mrb[0].mxu0
    %v391 = vadd.f32 %v168, %v390
    %392 = vmatprep.mubr.f32.mxu0 0.0
    %393 = vmatmul.mubr.f32.gmra.mrb[0].mxu0 %v86
    %v394 = vpop.f32.mrb[0].mxu0
    %v395 = vadd.f32 %v164, %v394
    %v396 = vpop.f32.mrb[0].mxu0
    %v397 = vadd.f32 %v168, %v396
    %398 = vdwg.mxu0
    %399 = vst [vmem:[#allocation2] sm:$0xff] %v240
    %400 = vst [vmem:[#allocation2 + $0x8] sm:$0xff] %v242
    %401 = vst [vmem:[#allocation2 + $0x10] sm:$0xff] %v353
    %402 = vst [vmem:[#allocation2 + $0x18] sm:$0xff] %v355
    %403 = vst [vmem:[#allocation2 + $0x20] sm:$0xff] %v246
    %404 = vst [vmem:[#allocation2 + $0x28] sm:$0xff] %v248
    %405 = vst [vmem:[#allocation2 + $0x30] sm:$0xff] %v359
    %406 = vst [vmem:[#allocation2 + $0x38] sm:$0xff] %v361
    %407 = vst [vmem:[#allocation2 + $0x40] sm:$0xff] %v252
    %408 = vst [vmem:[#allocation2 + $0x48] sm:$0xff] %v254
    %409 = vst [vmem:[#allocation2 + $0x50] sm:$0xff] %v365
    %410 = vst [vmem:[#allocation2 + $0x58] sm:$0xff] %v367
    %411 = vst [vmem:[#allocation2 + $0x60] sm:$0xff] %v258
    %412 = vst [vmem:[#allocation2 + $0x68] sm:$0xff] %v260
    %413 = vst [vmem:[#allocation2 + $0x70] sm:$0xff] %v371
    %414 = vst [vmem:[#allocation2 + $0x78] sm:$0xff] %v373
    %415 = vst [vmem:[#allocation2 + $0x80] sm:$0xff] %v264
    %416 = vst [vmem:[#allocation2 + $0x88] sm:$0xff] %v266
    %417 = vst [vmem:[#allocation2 + $0x90] sm:$0xff] %v377
    %418 = vst [vmem:[#allocation2 + $0x98] sm:$0xff] %v379
    %419 = vst [vmem:[#allocation2 + $0xa0] sm:$0xff] %v270
    %420 = vst [vmem:[#allocation2 + $0xa8] sm:$0xff] %v272
    %421 = vst [vmem:[#allocation2 + $0xb0] sm:$0xff] %v383
    %422 = vst [vmem:[#allocation2 + $0xb8] sm:$0xff] %v385
    %423 = vst [vmem:[#allocation2 + $0xc0] sm:$0xff] %v276
    %424 = vst [vmem:[#allocation2 + $0xc8] sm:$0xff] %v278
    %425 = vst [vmem:[#allocation2 + $0xd0] sm:$0xff] %v389
    %426 = vst [vmem:[#allocation2 + $0xd8] sm:$0xff] %v391
    %427 = vst [vmem:[#allocation2 + $0xe0] sm:$0xff] %v282
    %428 = vst [vmem:[#allocation2 + $0xe8] sm:$0xff] %v284
    %429 = vst [vmem:[#allocation2 + $0xf0] sm:$0xff] %v395
    %430 = vst [vmem:[#allocation2 + $0xf8] sm:$0xff] %v397
    %v431 = vld [vmem:[#allocation8] sm:$0xff]
    %v432 = vld [vmem:[#allocation8 + $0x8] sm:$0xff]
    %v433 = vld [vmem:[#allocation8 + $0x10] sm:$0xff]
    %v434 = vld [vmem:[#allocation8 + $0x18] sm:$0xff]
    %v435 = vld [vmem:[#allocation8 + $0x20] sm:$0xff]
    %v436 = vld [vmem:[#allocation8 + $0x28] sm:$0xff]
    %v437 = vld [vmem:[#allocation8 + $0x30] sm:$0xff]
    %v438 = vld [vmem:[#allocation8 + $0x38] sm:$0xff]
    %v439 = vld [vmem:[#allocation8 + $0x40] sm:$0xff]
    %v440 = vld [vmem:[#allocation8 + $0x48] sm:$0xff]
    %v441 = vld [vmem:[#allocation8 + $0x50] sm:$0xff]
    %v442 = vld [vmem:[#allocation8 + $0x58] sm:$0xff]
    %v443 = vld [vmem:[#allocation8 + $0x60] sm:$0xff]
    %v444 = vld [vmem:[#allocation8 + $0x68] sm:$0xff]
    %v445 = vld [vmem:[#allocation8 + $0x70] sm:$0xff]
    %v446 = vld [vmem:[#allocation8 + $0x78] sm:$0xff]
    %v447 = vld [vmem:[#allocation8 + $0x80] sm:$0xff]
    %v448 = vld [vmem:[#allocation8 + $0x88] sm:$0xff]
    %v449 = vld [vmem:[#allocation8 + $0x90] sm:$0xff]
    %v450 = vld [vmem:[#allocation8 + $0x98] sm:$0xff]
    %v451 = vld [vmem:[#allocation8 + $0xa0] sm:$0xff]
    %v452 = vld [vmem:[#allocation8 + $0xa8] sm:$0xff]
    %v453 = vld [vmem:[#allocation8 + $0xb0] sm:$0xff]
    %v454 = vld [vmem:[#allocation8 + $0xb8] sm:$0xff]
    %v455 = vld [vmem:[#allocation8 + $0xc0] sm:$0xff]
    %v456 = vld [vmem:[#allocation8 + $0xc8] sm:$0xff]
    %v457 = vld [vmem:[#allocation8 + $0xd0] sm:$0xff]
    %v458 = vld [vmem:[#allocation8 + $0xd8] sm:$0xff]
    %v459 = vld [vmem:[#allocation8 + $0xe0] sm:$0xff]
    %v460 = vld [vmem:[#allocation8 + $0xe8] sm:$0xff]
    %v461 = vld [vmem:[#allocation8 + $0xf0] sm:$0xff]
    %v462 = vld [vmem:[#allocation8 + $0xf8] sm:$0xff]
    %v463 = vld [vmem:[#allocation8 + $0x100] sm:$0xff]
    %v464 = vld [vmem:[#allocation8 + $0x108] sm:$0xff]
    %v465 = vld [vmem:[#allocation8 + $0x110] sm:$0xff]
    %v466 = vld [vmem:[#allocation8 + $0x118] sm:$0xff]
    %v467 = vld [vmem:[#allocation8 + $0x120] sm:$0xff]
    %v468 = vld [vmem:[#allocation8 + $0x128] sm:$0xff]
    %v469 = vld [vmem:[#allocation8 + $0x130] sm:$0xff]
    %v470 = vld [vmem:[#allocation8 + $0x138] sm:$0xff]
    %v471 = vld [vmem:[#allocation8 + $0x140] sm:$0xff]
    %v472 = vld [vmem:[#allocation8 + $0x148] sm:$0xff]
    %v473 = vld [vmem:[#allocation8 + $0x150] sm:$0xff]
    %v474 = vld [vmem:[#allocation8 + $0x158] sm:$0xff]
    %v475 = vld [vmem:[#allocation8 + $0x160] sm:$0xff]
    %v476 = vld [vmem:[#allocation8 + $0x168] sm:$0xff]
    %v477 = vld [vmem:[#allocation8 + $0x170] sm:$0xff]
    %v478 = vld [vmem:[#allocation8 + $0x178] sm:$0xff]
    %v479 = vld [vmem:[#allocation8 + $0x180] sm:$0xff]
    %v480 = vld [vmem:[#allocation8 + $0x188] sm:$0xff]
    %v481 = vld [vmem:[#allocation8 + $0x190] sm:$0xff]
    %v482 = vld [vmem:[#allocation8 + $0x198] sm:$0xff]
    %v483 = vld [vmem:[#allocation8 + $0x1a0] sm:$0xff]
    %v484 = vld [vmem:[#allocation8 + $0x1a8] sm:$0xff]
    %v485 = vld [vmem:[#allocation8 + $0x1b0] sm:$0xff]
    %v486 = vld [vmem:[#allocation8 + $0x1b8] sm:$0xff]
    %v487 = vld [vmem:[#allocation8 + $0x1c0] sm:$0xff]
    %v488 = vld [vmem:[#allocation8 + $0x1c8] sm:$0xff]
    %v489 = vld [vmem:[#allocation8 + $0x1d0] sm:$0xff]
    %v490 = vld [vmem:[#allocation8 + $0x1d8] sm:$0xff]
    %v491 = vld [vmem:[#allocation8 + $0x1e0] sm:$0xff]
    %v492 = vld [vmem:[#allocation8 + $0x1e8] sm:$0xff]
    %v493 = vld [vmem:[#allocation8 + $0x1f0] sm:$0xff]
    %v494 = vld [vmem:[#allocation8 + $0x1f8] sm:$0xff]
    %v495 = vld [vmem:[#allocation2] sm:$0xff]
    %v496 = vld [vmem:[#allocation2 + $0x8] sm:$0xff]
    %v497 = vld [vmem:[#allocation2 + $0x10] sm:$0xff]
    %v498 = vld [vmem:[#allocation2 + $0x18] sm:$0xff]
    %499 = vmatprep.subr.mxu0 %v432
    %500 = vmatpush1.msra.mxu0 %v431
    %501 = vmatprep.subr.mxu0 %v436
    %502 = vmatpush1.msra.mxu0 %v435
    %503 = vmatprep.subr.mxu0 %v440
    %504 = vmatpush1.msra.mxu0 %v439
    %505 = vmatprep.subr.mxu0 %v444
    %506 = vmatpush1.msra.mxu0 %v443
    %507 = vmatprep.subr.mxu0 %v448
    %508 = vmatpush1.msra.mxu0 %v447
    %509 = vmatprep.subr.mxu0 %v452
    %510 = vmatpush1.msra.mxu0 %v451
    %511 = vmatprep.subr.mxu0 %v456
    %512 = vmatpush1.msra.mxu0 %v455
    %513 = vmatprep.subr.mxu0 %v460
    %514 = vmatpush1.msra.mxu0 %v459
    %515 = vmatprep.subr.mxu0 %v464
    %516 = vmatpush1.msra.mxu0 %v463
    %517 = vmatprep.subr.mxu0 %v468
    %518 = vmatpush1.msra.mxu0 %v467
    %519 = vmatprep.subr.mxu0 %v472
    %520 = vmatpush1.msra.mxu0 %v471
    %521 = vmatprep.subr.mxu0 %v476
    %522 = vmatpush1.msra.mxu0 %v475
    %523 = vmatprep.subr.mxu0 %v480
    %524 = vmatpush1.msra.mxu0 %v479
    %525 = vmatprep.subr.mxu0 %v484
    %526 = vmatpush1.msra.mxu0 %v483
    %527 = vmatprep.subr.mxu0 %v488
    %528 = vmatpush1.msra.mxu0 %v487
    %529 = vmatprep.subr.mxu0 %v492
    %530 = vmatpush1.msra.mxu0 %v491
    %531 = vmatprep.subr.mxu0 0.0
    %532 = vmatpush1.msra.mxu0 0.0
    %533 = vmatprep.subr.mxu0 0.0
    %534 = vmatpush1.msra.mxu0 0.0
    %535 = vmatprep.subr.mxu0 0.0
    %536 = vmatpush1.msra.mxu0 0.0
    %537 = vmatprep.subr.mxu0 0.0
    %538 = vmatpush1.msra.mxu0 0.0
    %539 = vmatprep.subr.mxu0 0.0
    %540 = vmatpush1.msra.mxu0 0.0
    %541 = vmatprep.subr.mxu0 0.0
    %542 = vmatpush1.msra.mxu0 0.0
    %543 = vmatprep.subr.mxu0 0.0
    %544 = vmatpush1.msra.mxu0 0.0
    %545 = vmatprep.subr.mxu0 0.0
    %546 = vmatpush1.msra.mxu0 0.0
    %547 = vmatprep.subr.mxu0 0.0
    %548 = vmatpush1.msra.mxu0 0.0
    %549 = vmatprep.subr.mxu0 0.0
    %550 = vmatpush1.msra.mxu0 0.0
    %551 = vmatprep.subr.mxu0 0.0
    %552 = vmatpush1.msra.mxu0 0.0
    %553 = vmatprep.subr.mxu0 0.0
    %554 = vmatpush1.msra.mxu0 0.0
    %555 = vmatprep.subr.mxu0 0.0
    %556 = vmatpush1.msra.mxu0 0.0
    %557 = vmatprep.subr.mxu0 0.0
    %558 = vmatpush1.msra.mxu0 0.0
    %559 = vmatprep.subr.mxu0 0.0
    %560 = vmatpush1.msra.mxu0 0.0
    %561 = vmatprep.subr.mxu0 0.0
    %562 = vmatpush1.msra.mxu0 0.0
    %563 = vmatprep.mubr.f32.mxu0 0.0
    %564 = vmatmul.mubr.f32.gmra.mrb[0].mxu0 0.0
    %v565 = vpop.f32.mrb[0].mxu0
    %v566 = vadd.f32 0.0, %v565
    %v567 = vpop.f32.mrb[0].mxu0
    %v568 = vadd.f32 0.0, %v567
    %569 = vdwg.mxu0
    %570 = vmatprep.subr.mxu0 %v434
    %571 = vmatpush1.msra.mxu0 %v433
    %572 = vmatprep.subr.mxu0 %v438
    %573 = vmatpush1.msra.mxu0 %v437
    %574 = vmatprep.subr.mxu0 %v442
    %575 = vmatpush1.msra.mxu0 %v441
    %576 = vmatprep.subr.mxu0 %v446
    %577 = vmatpush1.msra.mxu0 %v445
    %578 = vmatprep.subr.mxu0 %v450
    %579 = vmatpush1.msra.mxu0 %v449
    %580 = vmatprep.subr.mxu0 %v454
    %581 = vmatpush1.msra.mxu0 %v453
    %582 = vmatprep.subr.mxu0 %v458
    %583 = vmatpush1.msra.mxu0 %v457
    %584 = vmatprep.subr.mxu0 %v462
    %585 = vmatpush1.msra.mxu0 %v461
    %586 = vmatprep.subr.mxu0 %v466
    %587 = vmatpush1.msra.mxu0 %v465
    %588 = vmatprep.subr.mxu0 %v470
    %589 = vmatpush1.msra.mxu0 %v469
    %590 = vmatprep.subr.mxu0 %v474
    %591 = vmatpush1.msra.mxu0 %v473
    %592 = vmatprep.subr.mxu0 %v478
    %593 = vmatpush1.msra.mxu0 %v477
    %594 = vmatprep.subr.mxu0 %v482
    %595 = vmatpush1.msra.mxu0 %v481
    %596 = vmatprep.subr.mxu0 %v486
    %597 = vmatpush1.msra.mxu0 %v485
    %598 = vmatprep.subr.mxu0 %v490
    %599 = vmatpush1.msra.mxu0 %v489
    %600 = vmatprep.subr.mxu0 %v494
    %601 = vmatpush1.msra.mxu0 %v493
    %602 = vmatprep.subr.mxu0 0.0
    %603 = vmatpush1.msra.mxu0 0.0
    %604 = vmatprep.subr.mxu0 0.0
    %605 = vmatpush1.msra.mxu0 0.0
    %606 = vmatprep.subr.mxu0 0.0
    %607 = vmatpush1.msra.mxu0 0.0
    %608 = vmatprep.subr.mxu0 0.0
    %609 = vmatpush1.msra.mxu0 0.0
    %610 = vmatprep.subr.mxu0 0.0
    %611 = vmatpush1.msra.mxu0 0.0
    %612 = vmatprep.subr.mxu0 0.0
    %613 = vmatpush1.msra.mxu0 0.0
    %614 = vmatprep.subr.mxu0 0.0
    %615 = vmatpush1.msra.mxu0 0.0
    %616 = vmatprep.subr.mxu0 0.0
    %617 = vmatpush1.msra.mxu0 0.0
    %618 = vmatprep.subr.mxu0 0.0
    %619 = vmatpush1.msra.mxu0 0.0
    %620 = vmatprep.subr.mxu0 0.0
    %621 = vmatpush1.msra.mxu0 0.0
    %622 = vmatprep.subr.mxu0 0.0
    %623 = vmatpush1.msra.mxu0 0.0
    %624 = vmatprep.subr.mxu0 0.0
    %625 = vmatpush1.msra.mxu0 0.0
    %626 = vmatprep.subr.mxu0 0.0
    %627 = vmatpush1.msra.mxu0 0.0
    %628 = vmatprep.subr.mxu0 0.0
    %629 = vmatpush1.msra.mxu0 0.0
    %630 = vmatprep.subr.mxu0 0.0
    %631 = vmatpush1.msra.mxu0 0.0
    %632 = vmatprep.subr.mxu0 0.0
    %633 = vmatpush1.msra.mxu0 0.0
    %634 = vmatprep.mubr.f32.mxu0 0.0
    %635 = vmatmul.mubr.f32.gmra.mrb[0].mxu0 0.0
    %v636 = vpop.f32.mrb[0].mxu0
    %v637 = vadd.f32 0.0, %v636
    %v638 = vpop.f32.mrb[0].mxu0
    %v639 = vadd.f32 0.0, %v638
    %640 = vdwg.mxu0
    %v641 = vadd.f32 %v495, %v566
    %v642 = vadd.f32 %v496, %v568
    %v643 = vadd.f32 %v497, %v637
    %v644 = vadd.f32 %v498, %v639
    %v645 = vxor.u32 %v641, 2147483648
    %v646 = vmul.f32 %v645, 1.442695
    %v647 = vpow.pop %v646
    %v648 = vadd.f32 %v647, 1.0
    %v649 = vrcp.pop %v648
    %v650 = vmul.f32 1.0, %v649
    %v651 = vxor.u32 %v642, 2147483648
    %v652 = vmul.f32 %v651, 1.442695
    %v653 = vpow.pop %v652
    %v654 = vadd.f32 %v653, 1.0
    %v655 = vrcp.pop %v654
    %v656 = vmul.f32 1.0, %v655
    %v657 = vtanh.pop %v643
    %v658 = vxor.u32 %v644, 2147483648
    %v659 = vmul.f32 %v658, 1.442695
    %v660 = vpow.pop %v659
    %v661 = vadd.f32 %v660, 1.0
    %v662 = vrcp.pop %v661
    %v663 = vmul.f32 1.0, %v662
    %v664 = vmul.f32 %v656, 0.0
    %v665 = vmul.f32 %v650, %v657
    %v666 = vadd.f32 %v664, %v665
    %v667 = vtanh.pop %v666
    %v668 = vmul.f32 %v663, %v667
    %s669 = scalar_lea.vmem [#allocation2], 32
    %v670 = vld [vmem:[%s669] sm:$0xff]
    %v671 = vld [vmem:[%s669 + $0x8] sm:$0xff]
    %v672 = vld [vmem:[%s669 + $0x10] sm:$0xff]
    %v673 = vld [vmem:[%s669 + $0x18] sm:$0xff]
    %674 = vmatprep.subr.mxu0 %v432
    %675 = vmatpush1.msra.mxu0 %v431
    %676 = vmatprep.subr.mxu0 %v436
    %677 = vmatpush1.msra.mxu0 %v435
    %678 = vmatprep.subr.mxu0 %v440
    %679 = vmatpush1.msra.mxu0 %v439
    %680 = vmatprep.subr.mxu0 %v444
    %681 = vmatpush1.msra.mxu0 %v443
    %682 = vmatprep.subr.mxu0 %v448
    %683 = vmatpush1.msra.mxu0 %v447
    %684 = vmatprep.subr.mxu0 %v452
    %685 = vmatpush1.msra.mxu0 %v451
    %686 = vmatprep.subr.mxu0 %v456
    %687 = vmatpush1.msra.mxu0 %v455
    %688 = vmatprep.subr.mxu0 %v460
    %689 = vmatpush1.msra.mxu0 %v459
    %690 = vmatprep.subr.mxu0 %v464
    %691 = vmatpush1.msra.mxu0 %v463
    %692 = vmatprep.subr.mxu0 %v468
    %693 = vmatpush1.msra.mxu0 %v467
    %694 = vmatprep.subr.mxu0 %v472
    %695 = vmatpush1.msra.mxu0 %v471
    %696 = vmatprep.subr.mxu0 %v476
    %697 = vmatpush1.msra.mxu0 %v475
    %698 = vmatprep.subr.mxu0 %v480
    %699 = vmatpush1.msra.mxu0 %v479
    %700 = vmatprep.subr.mxu0 %v484
    %701 = vmatpush1.msra.mxu0 %v483
    %702 = vmatprep.subr.mxu0 %v488
    %703 = vmatpush1.msra.mxu0 %v487
    %704 = vmatprep.subr.mxu0 %v492
    %705 = vmatpush1.msra.mxu0 %v491
    %706 = vmatprep.subr.mxu0 0.0
    %707 = vmatpush1.msra.mxu0 0.0
    %708 = vmatprep.subr.mxu0 0.0
    %709 = vmatpush1.msra.mxu0 0.0
    %710 = vmatprep.subr.mxu0 0.0
    %711 = vmatpush1.msra.mxu0 0.0
    %712 = vmatprep.subr.mxu0 0.0
    %713 = vmatpush1.msra.mxu0 0.0
    %714 = vmatprep.subr.mxu0 0.0
    %715 = vmatpush1.msra.mxu0 0.0
    %716 = vmatprep.subr.mxu0 0.0
    %717 = vmatpush1.msra.mxu0 0.0
    %718 = vmatprep.subr.mxu0 0.0
    %719 = vmatpush1.msra.mxu0 0.0
    %720 = vmatprep.subr.mxu0 0.0
    %721 = vmatpush1.msra.mxu0 0.0
    %722 = vmatprep.subr.mxu0 0.0
    %723 = vmatpush1.msra.mxu0 0.0
    %724 = vmatprep.subr.mxu0 0.0
    %725 = vmatpush1.msra.mxu0 0.0
    %726 = vmatprep.subr.mxu0 0.0
    %727 = vmatpush1.msra.mxu0 0.0
    %728 = vmatprep.subr.mxu0 0.0
    %729 = vmatpush1.msra.mxu0 0.0
    %730 = vmatprep.subr.mxu0 0.0
    %731 = vmatpush1.msra.mxu0 0.0
    %732 = vmatprep.subr.mxu0 0.0
    %733 = vmatpush1.msra.mxu0 0.0
    %734 = vmatprep.subr.mxu0 0.0
    %735 = vmatpush1.msra.mxu0 0.0
    %736 = vmatprep.subr.mxu0 0.0
    %737 = vmatpush1.msra.mxu0 0.0
    %738 = vmatprep.mubr.f32.mxu0 0.0
    %739 = vmatmul.mubr.f32.gmra.mrb[0].mxu0 %v668
    %v740 = vpop.f32.mrb[0].mxu0
    %v741 = vadd.f32 0.0, %v740
    %v742 = vpop.f32.mrb[0].mxu0
    %v743 = vadd.f32 0.0, %v742
    %744 = vdwg.mxu0
    %745 = vmatprep.subr.mxu0 %v434
    %746 = vmatpush1.msra.mxu0 %v433
    %747 = vmatprep.subr.mxu0 %v438
    %748 = vmatpush1.msra.mxu0 %v437
    %749 = vmatprep.subr.mxu0 %v442
    %750 = vmatpush1.msra.mxu0 %v441
    %751 = vmatprep.subr.mxu0 %v446
    %752 = vmatpush1.msra.mxu0 %v445
    %753 = vmatprep.subr.mxu0 %v450
    %754 = vmatpush1.msra.mxu0 %v449
    %755 = vmatprep.subr.mxu0 %v454
    %756 = vmatpush1.msra.mxu0 %v453
    %757 = vmatprep.subr.mxu0 %v458
    %758 = vmatpush1.msra.mxu0 %v457
    %759 = vmatprep.subr.mxu0 %v462
    %760 = vmatpush1.msra.mxu0 %v461
    %761 = vmatprep.subr.mxu0 %v466
    %762 = vmatpush1.msra.mxu0 %v465
    %763 = vmatprep.subr.mxu0 %v470
    %764 = vmatpush1.msra.mxu0 %v469
    %765 = vmatprep.subr.mxu0 %v474
    %766 = vmatpush1.msra.mxu0 %v473
    %767 = vmatprep.subr.mxu0 %v478
    %768 = vmatpush1.msra.mxu0 %v477
    %769 = vmatprep.subr.mxu0 %v482
    %770 = vmatpush1.msra.mxu0 %v481
    %771 = vmatprep.subr.mxu0 %v486
    %772 = vmatpush1.msra.mxu0 %v485
    %773 = vmatprep.subr.mxu0 %v490
    %774 = vmatpush1.msra.mxu0 %v489
    %775 = vmatprep.subr.mxu0 %v494
    %776 = vmatpush1.msra.mxu0 %v493
    %777 = vmatprep.subr.mxu0 0.0
    %778 = vmatpush1.msra.mxu0 0.0
    %779 = vmatprep.subr.mxu0 0.0
    %780 = vmatpush1.msra.mxu0 0.0
    %781 = vmatprep.subr.mxu0 0.0
    %782 = vmatpush1.msra.mxu0 0.0
    %783 = vmatprep.subr.mxu0 0.0
    %784 = vmatpush1.msra.mxu0 0.0
    %785 = vmatprep.subr.mxu0 0.0
    %786 = vmatpush1.msra.mxu0 0.0
    %787 = vmatprep.subr.mxu0 0.0
    %788 = vmatpush1.msra.mxu0 0.0
    %789 = vmatprep.subr.mxu0 0.0
    %790 = vmatpush1.msra.mxu0 0.0
    %791 = vmatprep.subr.mxu0 0.0
    %792 = vmatpush1.msra.mxu0 0.0
    %793 = vmatprep.subr.mxu0 0.0
    %794 = vmatpush1.msra.mxu0 0.0
    %795 = vmatprep.subr.mxu0 0.0
    %796 = vmatpush1.msra.mxu0 0.0
    %797 = vmatprep.subr.mxu0 0.0
    %798 = vmatpush1.msra.mxu0 0.0
    %799 = vmatprep.subr.mxu0 0.0
    %800 = vmatpush1.msra.mxu0 0.0
    %801 = vmatprep.subr.mxu0 0.0
    %802 = vmatpush1.msra.mxu0 0.0
    %803 = vmatprep.subr.mxu0 0.0
    %804 = vmatpush1.msra.mxu0 0.0
    %805 = vmatprep.subr.mxu0 0.0
    %806 = vmatpush1.msra.mxu0 0.0
    %807 = vmatprep.subr.mxu0 0.0
    %808 = vmatpush1.msra.mxu0 0.0
    %809 = vmatprep.mubr.f32.mxu0 0.0
    %810 = vmatmul.mubr.f32.gmra.mrb[0].mxu0 %v668
    %v811 = vpop.f32.mrb[0].mxu0
    %v812 = vadd.f32 0.0, %v811
    %v813 = vpop.f32.mrb[0].mxu0
    %v814 = vadd.f32 0.0, %v813
    %815 = vdwg.mxu0
    %v816 = vadd.f32 %v670, %v741
    %v817 = vadd.f32 %v671, %v743
    %v818 = vadd.f32 %v672, %v812
    %v819 = vadd.f32 %v673, %v814
    %v820 = vxor.u32 %v816, 2147483648
    %v821 = vmul.f32 %v820, 1.442695
    %v822 = vpow.pop %v821
    %v823 = vadd.f32 %v822, 1.0
    %v824 = vrcp.pop %v823
    %v825 = vmul.f32 1.0, %v824
    %v826 = vxor.u32 %v817, 2147483648
    %v827 = vmul.f32 %v826, 1.442695
    %v828 = vpow.pop %v827
    %v829 = vadd.f32 %v828, 1.0
    %v830 = vrcp.pop %v829
    %v831 = vmul.f32 1.0, %v830
    %v832 = vtanh.pop %v818
    %v833 = vxor.u32 %v819, 2147483648
    %v834 = vmul.f32 %v833, 1.442695
    %v835 = vpow.pop %v834
    %v836 = vadd.f32 %v835, 1.0
    %v837 = vrcp.pop %v836
    %v838 = vmul.f32 1.0, %v837
    %v839 = vmul.f32 %v831, %v666
    %v840 = vmul.f32 %v825, %v832
    %v841 = vadd.f32 %v839, %v840
    %v842 = vtanh.pop %v841
    %v843 = vmul.f32 %v838, %v842
    %s844 = scalar_lea.vmem [#allocation2], 64
    %v845 = vld [vmem:[%s844] sm:$0xff]
    %v846 = vld [vmem:[%s844 + $0x8] sm:$0xff]
    %v847 = vld [vmem:[%s844 + $0x10] sm:$0xff]
    %v848 = vld [vmem:[%s844 + $0x18] sm:$0xff]
    %849 = vmatprep.subr.mxu0 %v432
    %850 = vmatpush1.msra.mxu0 %v431
    %851 = vmatprep.subr.mxu0 %v436
    %852 = vmatpush1.msra.mxu0 %v435
    %853 = vmatprep.subr.mxu0 %v440
    %854 = vmatpush1.msra.mxu0 %v439
    %855 = vmatprep.subr.mxu0 %v444
    %856 = vmatpush1.msra.mxu0 %v443
    %857 = vmatprep.subr.mxu0 %v448
    %858 = vmatpush1.msra.mxu0 %v447
    %859 = vmatprep.subr.mxu0 %v452
    %860 = vmatpush1.msra.mxu0 %v451
    %861 = vmatprep.subr.mxu0 %v456
    %862 = vmatpush1.msra.mxu0 %v455
    %863 = vmatprep.subr.mxu0 %v460
    %864 = vmatpush1.msra.mxu0 %v459
    %865 = vmatprep.subr.mxu0 %v464
    %866 = vmatpush1.msra.mxu0 %v463
    %867 = vmatprep.subr.mxu0 %v468
    %868 = vmatpush1.msra.mxu0 %v467
    %869 = vmatprep.subr.mxu0 %v472
    %870 = vmatpush1.msra.mxu0 %v471
    %871 = vmatprep.subr.mxu0 %v476
    %872 = vmatpush1.msra.mxu0 %v475
    %873 = vmatprep.subr.mxu0 %v480
    %874 = vmatpush1.msra.mxu0 %v479
    %875 = vmatprep.subr.mxu0 %v484
    %876 = vmatpush1.msra.mxu0 %v483
    %877 = vmatprep.subr.mxu0 %v488
    %878 = vmatpush1.msra.mxu0 %v487
    %879 = vmatprep.subr.mxu0 %v492
    %880 = vmatpush1.msra.mxu0 %v491
    %881 = vmatprep.subr.mxu0 0.0
    %882 = vmatpush1.msra.mxu0 0.0
    %883 = vmatprep.subr.mxu0 0.0
    %884 = vmatpush1.msra.mxu0 0.0
    %885 = vmatprep.subr.mxu0 0.0
    %886 = vmatpush1.msra.mxu0 0.0
    %887 = vmatprep.subr.mxu0 0.0
    %888 = vmatpush1.msra.mxu0 0.0
    %889 = vmatprep.subr.mxu0 0.0
    %890 = vmatpush1.msra.mxu0 0.0
    %891 = vmatprep.subr.mxu0 0.0
    %892 = vmatpush1.msra.mxu0 0.0
    %893 = vmatprep.subr.mxu0 0.0
    %894 = vmatpush1.msra.mxu0 0.0
    %895 = vmatprep.subr.mxu0 0.0
    %896 = vmatpush1.msra.mxu0 0.0
    %897 = vmatprep.subr.mxu0 0.0
    %898 = vmatpush1.msra.mxu0 0.0
    %899 = vmatprep.subr.mxu0 0.0
    %900 = vmatpush1.msra.mxu0 0.0
    %901 = vmatprep.subr.mxu0 0.0
    %902 = vmatpush1.msra.mxu0 0.0
    %903 = vmatprep.subr.mxu0 0.0
    %904 = vmatpush1.msra.mxu0 0.0
    %905 = vmatprep.subr.mxu0 0.0
    %906 = vmatpush1.msra.mxu0 0.0
    %907 = vmatprep.subr.mxu0 0.0
    %908 = vmatpush1.msra.mxu0 0.0
    %909 = vmatprep.subr.mxu0 0.0
    %910 = vmatpush1.msra.mxu0 0.0
    %911 = vmatprep.subr.mxu0 0.0
    %912 = vmatpush1.msra.mxu0 0.0
    %913 = vmatprep.mubr.f32.mxu0 0.0
    %914 = vmatmul.mubr.f32.gmra.mrb[0].mxu0 %v843
    %v915 = vpop.f32.mrb[0].mxu0
    %v916 = vadd.f32 0.0, %v915
    %v917 = vpop.f32.mrb[0].mxu0
    %v918 = vadd.f32 0.0, %v917
    %919 = vdwg.mxu0
    %920 = vmatprep.subr.mxu0 %v434
    %921 = vmatpush1.msra.mxu0 %v433
    %922 = vmatprep.subr.mxu0 %v438
    %923 = vmatpush1.msra.mxu0 %v437
    %924 = vmatprep.subr.mxu0 %v442
    %925 = vmatpush1.msra.mxu0 %v441
    %926 = vmatprep.subr.mxu0 %v446
    %927 = vmatpush1.msra.mxu0 %v445
    %928 = vmatprep.subr.mxu0 %v450
    %929 = vmatpush1.msra.mxu0 %v449
    %930 = vmatprep.subr.mxu0 %v454
    %931 = vmatpush1.msra.mxu0 %v453
    %932 = vmatprep.subr.mxu0 %v458
    %933 = vmatpush1.msra.mxu0 %v457
    %934 = vmatprep.subr.mxu0 %v462
    %935 = vmatpush1.msra.mxu0 %v461
    %936 = vmatprep.subr.mxu0 %v466
    %937 = vmatpush1.msra.mxu0 %v465
    %938 = vmatprep.subr.mxu0 %v470
    %939 = vmatpush1.msra.mxu0 %v469
    %940 = vmatprep.subr.mxu0 %v474
    %941 = vmatpush1.msra.mxu0 %v473
    %942 = vmatprep.subr.mxu0 %v478
    %943 = vmatpush1.msra.mxu0 %v477
    %944 = vmatprep.subr.mxu0 %v482
    %945 = vmatpush1.msra.mxu0 %v481
    %946 = vmatprep.subr.mxu0 %v486
    %947 = vmatpush1.msra.mxu0 %v485
    %948 = vmatprep.subr.mxu0 %v490
    %949 = vmatpush1.msra.mxu0 %v489
    %950 = vmatprep.subr.mxu0 %v494
    %951 = vmatpush1.msra.mxu0 %v493
    %952 = vmatprep.subr.mxu0 0.0
    %953 = vmatpush1.msra.mxu0 0.0
    %954 = vmatprep.subr.mxu0 0.0
    %955 = vmatpush1.msra.mxu0 0.0
    %956 = vmatprep.subr.mxu0 0.0
    %957 = vmatpush1.msra.mxu0 0.0
    %958 = vmatprep.subr.mxu0 0.0
    %959 = vmatpush1.msra.mxu0 0.0
    %960 = vmatprep.subr.mxu0 0.0
    %961 = vmatpush1.msra.mxu0 0.0
    %962 = vmatprep.subr.mxu0 0.0
    %963 = vmatpush1.msra.mxu0 0.0
    %964 = vmatprep.subr.mxu0 0.0
    %965 = vmatpush1.msra.mxu0 0.0
    %966 = vmatprep.subr.mxu0 0.0
    %967 = vmatpush1.msra.mxu0 0.0
    %968 = vmatprep.subr.mxu0 0.0
    %969 = vmatpush1.msra.mxu0 0.0
    %970 = vmatprep.subr.mxu0 0.0
    %971 = vmatpush1.msra.mxu0 0.0
    %972 = vmatprep.subr.mxu0 0.0
    %973 = vmatpush1.msra.mxu0 0.0
    %974 = vmatprep.subr.mxu0 0.0
    %975 = vmatpush1.msra.mxu0 0.0
    %976 = vmatprep.subr.mxu0 0.0
    %977 = vmatpush1.msra.mxu0 0.0
    %978 = vmatprep.subr.mxu0 0.0
    %979 = vmatpush1.msra.mxu0 0.0
    %980 = vmatprep.subr.mxu0 0.0
    %981 = vmatpush1.msra.mxu0 0.0
    %982 = vmatprep.subr.mxu0 0.0
    %983 = vmatpush1.msra.mxu0 0.0
    %984 = vmatprep.mubr.f32.mxu0 0.0
    %985 = vmatmul.mubr.f32.gmra.mrb[0].mxu0 %v843
    %v986 = vpop.f32.mrb[0].mxu0
    %v987 = vadd.f32 0.0, %v986
    %v988 = vpop.f32.mrb[0].mxu0
    %v989 = vadd.f32 0.0, %v988
    %990 = vdwg.mxu0
    %v991 = vadd.f32 %v845, %v916
    %v992 = vadd.f32 %v846, %v918
    %v993 = vadd.f32 %v847, %v987
    %v994 = vadd.f32 %v848, %v989
    %v995 = vxor.u32 %v991, 2147483648
    %v996 = vmul.f32 %v995, 1.442695
    %v997 = vpow.pop %v996
    %v998 = vadd.f32 %v997, 1.0
    %v999 = vrcp.pop %v998
    %v1000 = vmul.f32 1.0, %v999
    %v1001 = vxor.u32 %v992, 2147483648
    %v1002 = vmul.f32 %v1001, 1.442695
    %v1003 = vpow.pop %v1002
    %v1004 = vadd.f32 %v1003, 1.0
    %v1005 = vrcp.pop %v1004
    %v1006 = vmul.f32 1.0, %v1005
    %v1007 = vtanh.pop %v993
    %v1008 = vxor.u32 %v994, 2147483648
    %v1009 = vmul.f32 %v1008, 1.442695
    %v1010 = vpow.pop %v1009
    %v1011 = vadd.f32 %v1010, 1.0
    %v1012 = vrcp.pop %v1011
    %v1013 = vmul.f32 1.0, %v1012
    %v1014 = vmul.f32 %v1006, %v841
    %v1015 = vmul.f32 %v1000, %v1007
    %v1016 = vadd.f32 %v1014, %v1015
    %v1017 = vtanh.pop %v1016
    %v1018 = vmul.f32 %v1013, %v1017
    %s1019 = scalar_lea.vmem [#allocation2], 96
    %v1020 = vld [vmem:[%s1019] sm:$0xff]
    %v1021 = vld [vmem:[%s1019 + $0x8] sm:$0xff]
    %v1022 = vld [vmem:[%s1019 + $0x10] sm:$0xff]
    %v1023 = vld [vmem:[%s1019 + $0x18] sm:$0xff]
    %1024 = vmatprep.subr.mxu0 %v432
    %1025 = vmatpush1.msra.mxu0 %v431
    %1026 = vmatprep.subr.mxu0 %v436
    %1027 = vmatpush1.msra.mxu0 %v435
    %1028 = vmatprep.subr.mxu0 %v440
    %1029 = vmatpush1.msra.mxu0 %v439
    %1030 = vmatprep.subr.mxu0 %v444
    %1031 = vmatpush1.msra.mxu0 %v443
    %1032 = vmatprep.subr.mxu0 %v448
    %1033 = vmatpush1.msra.mxu0 %v447
    %1034 = vmatprep.subr.mxu0 %v452
    %1035 = vmatpush1.msra.mxu0 %v451
    %1036 = vmatprep.subr.mxu0 %v456
    %1037 = vmatpush1.msra.mxu0 %v455
    %1038 = vmatprep.subr.mxu0 %v460
    %1039 = vmatpush1.msra.mxu0 %v459
    %1040 = vmatprep.subr.mxu0 %v464
    %1041 = vmatpush1.msra.mxu0 %v463
    %1042 = vmatprep.subr.mxu0 %v468
    %1043 = vmatpush1.msra.mxu0 %v467
    %1044 = vmatprep.subr.mxu0 %v472
    %1045 = vmatpush1.msra.mxu0 %v471
    %1046 = vmatprep.subr.mxu0 %v476
    %1047 = vmatpush1.msra.mxu0 %v475
    %1048 = vmatprep.subr.mxu0 %v480
    %1049 = vmatpush1.msra.mxu0 %v479
    %1050 = vmatprep.subr.mxu0 %v484
    %1051 = vmatpush1.msra.mxu0 %v483
    %1052 = vmatprep.subr.mxu0 %v488
    %1053 = vmatpush1.msra.mxu0 %v487
    %1054 = vmatprep.subr.mxu0 %v492
    %1055 = vmatpush1.msra.mxu0 %v491
    %1056 = vmatprep.subr.mxu0 0.0
    %1057 = vmatpush1.msra.mxu0 0.0
    %1058 = vmatprep.subr.mxu0 0.0
    %1059 = vmatpush1.msra.mxu0 0.0
    %1060 = vmatprep.subr.mxu0 0.0
    %1061 = vmatpush1.msra.mxu0 0.0
    %1062 = vmatprep.subr.mxu0 0.0
    %1063 = vmatpush1.msra.mxu0 0.0
    %1064 = vmatprep.subr.mxu0 0.0
    %1065 = vmatpush1.msra.mxu0 0.0
    %1066 = vmatprep.subr.mxu0 0.0
    %1067 = vmatpush1.msra.mxu0 0.0
    %1068 = vmatprep.subr.mxu0 0.0
    %1069 = vmatpush1.msra.mxu0 0.0
    %1070 = vmatprep.subr.mxu0 0.0
    %1071 = vmatpush1.msra.mxu0 0.0
    %1072 = vmatprep.subr.mxu0 0.0
    %1073 = vmatpush1.msra.mxu0 0.0
    %1074 = vmatprep.subr.mxu0 0.0
    %1075 = vmatpush1.msra.mxu0 0.0
    %1076 = vmatprep.subr.mxu0 0.0
    %1077 = vmatpush1.msra.mxu0 0.0
    %1078 = vmatprep.subr.mxu0 0.0
    %1079 = vmatpush1.msra.mxu0 0.0
    %1080 = vmatprep.subr.mxu0 0.0
    %1081 = vmatpush1.msra.mxu0 0.0
    %1082 = vmatprep.subr.mxu0 0.0
    %1083 = vmatpush1.msra.mxu0 0.0
    %1084 = vmatprep.subr.mxu0 0.0
    %1085 = vmatpush1.msra.mxu0 0.0
    %1086 = vmatprep.subr.mxu0 0.0
    %1087 = vmatpush1.msra.mxu0 0.0
    %1088 = vmatprep.mubr.f32.mxu0 0.0
    %1089 = vmatmul.mubr.f32.gmra.mrb[0].mxu0 %v1018
    %v1090 = vpop.f32.mrb[0].mxu0
    %v1091 = vadd.f32 0.0, %v1090
    %v1092 = vpop.f32.mrb[0].mxu0
    %v1093 = vadd.f32 0.0, %v1092
    %1094 = vdwg.mxu0
    %1095 = vmatprep.subr.mxu0 %v434
    %1096 = vmatpush1.msra.mxu0 %v433
    %1097 = vmatprep.subr.mxu0 %v438
    %1098 = vmatpush1.msra.mxu0 %v437
    %1099 = vmatprep.subr.mxu0 %v442
    %1100 = vmatpush1.msra.mxu0 %v441
    %1101 = vmatprep.subr.mxu0 %v446
    %1102 = vmatpush1.msra.mxu0 %v445
    %1103 = vmatprep.subr.mxu0 %v450
    %1104 = vmatpush1.msra.mxu0 %v449
    %1105 = vmatprep.subr.mxu0 %v454
    %1106 = vmatpush1.msra.mxu0 %v453
    %1107 = vmatprep.subr.mxu0 %v458
    %1108 = vmatpush1.msra.mxu0 %v457
    %1109 = vmatprep.subr.mxu0 %v462
    %1110 = vmatpush1.msra.mxu0 %v461
    %1111 = vmatprep.subr.mxu0 %v466
    %1112 = vmatpush1.msra.mxu0 %v465
    %1113 = vmatprep.subr.mxu0 %v470
    %1114 = vmatpush1.msra.mxu0 %v469
    %1115 = vmatprep.subr.mxu0 %v474
    %1116 = vmatpush1.msra.mxu0 %v473
    %1117 = vmatprep.subr.mxu0 %v478
    %1118 = vmatpush1.msra.mxu0 %v477
    %1119 = vmatprep.subr.mxu0 %v482
    %1120 = vmatpush1.msra.mxu0 %v481
    %1121 = vmatprep.subr.mxu0 %v486
    %1122 = vmatpush1.msra.mxu0 %v485
    %1123 = vmatprep.subr.mxu0 %v490
    %1124 = vmatpush1.msra.mxu0 %v489
    %1125 = vmatprep.subr.mxu0 %v494
    %1126 = vmatpush1.msra.mxu0 %v493
    %1127 = vmatprep.subr.mxu0 0.0
    %1128 = vmatpush1.msra.mxu0 0.0
    %1129 = vmatprep.subr.mxu0 0.0
    %1130 = vmatpush1.msra.mxu0 0.0
    %1131 = vmatprep.subr.mxu0 0.0
    %1132 = vmatpush1.msra.mxu0 0.0
    %1133 = vmatprep.subr.mxu0 0.0
    %1134 = vmatpush1.msra.mxu0 0.0
    %1135 = vmatprep.subr.mxu0 0.0
    %1136 = vmatpush1.msra.mxu0 0.0
    %1137 = vmatprep.subr.mxu0 0.0
    %1138 = vmatpush1.msra.mxu0 0.0
    %1139 = vmatprep.subr.mxu0 0.0
    %1140 = vmatpush1.msra.mxu0 0.0
    %1141 = vmatprep.subr.mxu0 0.0
    %1142 = vmatpush1.msra.mxu0 0.0
    %1143 = vmatprep.subr.mxu0 0.0
    %1144 = vmatpush1.msra.mxu0 0.0
    %1145 = vmatprep.subr.mxu0 0.0
    %1146 = vmatpush1.msra.mxu0 0.0
    %1147 = vmatprep.subr.mxu0 0.0
    %1148 = vmatpush1.msra.mxu0 0.0
    %1149 = vmatprep.subr.mxu0 0.0
    %1150 = vmatpush1.msra.mxu0 0.0
    %1151 = vmatprep.subr.mxu0 0.0
    %1152 = vmatpush1.msra.mxu0 0.0
    %1153 = vmatprep.subr.mxu0 0.0
    %1154 = vmatpush1.msra.mxu0 0.0
    %1155 = vmatprep.subr.mxu0 0.0
    %1156 = vmatpush1.msra.mxu0 0.0
    %1157 = vmatprep.subr.mxu0 0.0
    %1158 = vmatpush1.msra.mxu0 0.0
    %1159 = vmatprep.mubr.f32.mxu0 0.0
    %1160 = vmatmul.mubr.f32.gmra.mrb[0].mxu0 %v1018
    %v1161 = vpop.f32.mrb[0].mxu0
    %v1162 = vadd.f32 0.0, %v1161
    %v1163 = vpop.f32.mrb[0].mxu0
    %v1164 = vadd.f32 0.0, %v1163
    %1165 = vdwg.mxu0
    %v1166 = vadd.f32 %v1020, %v1091
    %v1167 = vadd.f32 %v1021, %v1093
    %v1168 = vadd.f32 %v1022, %v1162
    %v1169 = vadd.f32 %v1023, %v1164
    %v1170 = vxor.u32 %v1166, 2147483648
    %v1171 = vmul.f32 %v1170, 1.442695
    %v1172 = vpow.pop %v1171
    %v1173 = vadd.f32 %v1172, 1.0
    %v1174 = vrcp.pop %v1173
    %v1175 = vmul.f32 1.0, %v1174
    %v1176 = vxor.u32 %v1167, 2147483648
    %v1177 = vmul.f32 %v1176, 1.442695
    %v1178 = vpow.pop %v1177
    %v1179 = vadd.f32 %v1178, 1.0
    %v1180 = vrcp.pop %v1179
    %v1181 = vmul.f32 1.0, %v1180
    %v1182 = vtanh.pop %v1168
    %v1183 = vxor.u32 %v1169, 2147483648
    %v1184 = vmul.f32 %v1183, 1.442695
    %v1185 = vpow.pop %v1184
    %v1186 = vadd.f32 %v1185, 1.0
    %v1187 = vrcp.pop %v1186
    %v1188 = vmul.f32 1.0, %v1187
    %v1189 = vmul.f32 %v1181, %v1016
    %v1190 = vmul.f32 %v1175, %v1182
    %v1191 = vadd.f32 %v1189, %v1190
    %v1192 = vtanh.pop %v1191
    %v1193 = vmul.f32 %v1188, %v1192
    %s1194 = scalar_lea.vmem [#allocation2], 128
    %v1195 = vld [vmem:[%s1194] sm:$0xff]
    %v1196 = vld [vmem:[%s1194 + $0x8] sm:$0xff]
    %v1197 = vld [vmem:[%s1194 + $0x10] sm:$0xff]
    %v1198 = vld [vmem:[%s1194 + $0x18] sm:$0xff]
    %1199 = vmatprep.subr.mxu0 %v432
    %1200 = vmatpush1.msra.mxu0 %v431
    %1201 = vmatprep.subr.mxu0 %v436
    %1202 = vmatpush1.msra.mxu0 %v435
    %1203 = vmatprep.subr.mxu0 %v440
    %1204 = vmatpush1.msra.mxu0 %v439
    %1205 = vmatprep.subr.mxu0 %v444
    %1206 = vmatpush1.msra.mxu0 %v443
    %1207 = vmatprep.subr.mxu0 %v448
    %1208 = vmatpush1.msra.mxu0 %v447
    %1209 = vmatprep.subr.mxu0 %v452
    %1210 = vmatpush1.msra.mxu0 %v451
    %1211 = vmatprep.subr.mxu0 %v456
    %1212 = vmatpush1.msra.mxu0 %v455
    %1213 = vmatprep.subr.mxu0 %v460
    %1214 = vmatpush1.msra.mxu0 %v459
    %1215 = vmatprep.subr.mxu0 %v464
    %1216 = vmatpush1.msra.mxu0 %v463
    %1217 = vmatprep.subr.mxu0 %v468
    %1218 = vmatpush1.msra.mxu0 %v467
    %1219 = vmatprep.subr.mxu0 %v472
    %1220 = vmatpush1.msra.mxu0 %v471
    %1221 = vmatprep.subr.mxu0 %v476
    %1222 = vmatpush1.msra.mxu0 %v475
    %1223 = vmatprep.subr.mxu0 %v480
    %1224 = vmatpush1.msra.mxu0 %v479
    %1225 = vmatprep.subr.mxu0 %v484
    %1226 = vmatpush1.msra.mxu0 %v483
    %1227 = vmatprep.subr.mxu0 %v488
    %1228 = vmatpush1.msra.mxu0 %v487
    %1229 = vmatprep.subr.mxu0 %v492
    %1230 = vmatpush1.msra.mxu0 %v491
    %1231 = vmatprep.subr.mxu0 0.0
    %1232 = vmatpush1.msra.mxu0 0.0
    %1233 = vmatprep.subr.mxu0 0.0
    %1234 = vmatpush1.msra.mxu0 0.0
    %1235 = vmatprep.subr.mxu0 0.0
    %1236 = vmatpush1.msra.mxu0 0.0
    %1237 = vmatprep.subr.mxu0 0.0
    %1238 = vmatpush1.msra.mxu0 0.0
    %1239 = vmatprep.subr.mxu0 0.0
    %1240 = vmatpush1.msra.mxu0 0.0
    %1241 = vmatprep.subr.mxu0 0.0
    %1242 = vmatpush1.msra.mxu0 0.0
    %1243 = vmatprep.subr.mxu0 0.0
    %1244 = vmatpush1.msra.mxu0 0.0
    %1245 = vmatprep.subr.mxu0 0.0
    %1246 = vmatpush1.msra.mxu0 0.0
    %1247 = vmatprep.subr.mxu0 0.0
    %1248 = vmatpush1.msra.mxu0 0.0
    %1249 = vmatprep.subr.mxu0 0.0
    %1250 = vmatpush1.msra.mxu0 0.0
    %1251 = vmatprep.subr.mxu0 0.0
    %1252 = vmatpush1.msra.mxu0 0.0
    %1253 = vmatprep.subr.mxu0 0.0
    %1254 = vmatpush1.msra.mxu0 0.0
    %1255 = vmatprep.subr.mxu0 0.0
    %1256 = vmatpush1.msra.mxu0 0.0
    %1257 = vmatprep.subr.mxu0 0.0
    %1258 = vmatpush1.msra.mxu0 0.0
    %1259 = vmatprep.subr.mxu0 0.0
    %1260 = vmatpush1.msra.mxu0 0.0
    %1261 = vmatprep.subr.mxu0 0.0
    %1262 = vmatpush1.msra.mxu0 0.0
    %1263 = vmatprep.mubr.f32.mxu0 0.0
    %1264 = vmatmul.mubr.f32.gmra.mrb[0].mxu0 %v1193
    %v1265 = vpop.f32.mrb[0].mxu0
    %v1266 = vadd.f32 0.0, %v1265
    %v1267 = vpop.f32.mrb[0].mxu0
    %v1268 = vadd.f32 0.0, %v1267
    %1269 = vdwg.mxu0
    %1270 = vmatprep.subr.mxu0 %v434
    %1271 = vmatpush1.msra.mxu0 %v433
    %1272 = vmatprep.subr.mxu0 %v438
    %1273 = vmatpush1.msra.mxu0 %v437
    %1274 = vmatprep.subr.mxu0 %v442
    %1275 = vmatpush1.msra.mxu0 %v441
    %1276 = vmatprep.subr.mxu0 %v446
    %1277 = vmatpush1.msra.mxu0 %v445
    %1278 = vmatprep.subr.mxu0 %v450
    %1279 = vmatpush1.msra.mxu0 %v449
    %1280 = vmatprep.subr.mxu0 %v454
    %1281 = vmatpush1.msra.mxu0 %v453
    %1282 = vmatprep.subr.mxu0 %v458
    %1283 = vmatpush1.msra.mxu0 %v457
    %1284 = vmatprep.subr.mxu0 %v462
    %1285 = vmatpush1.msra.mxu0 %v461
    %1286 = vmatprep.subr.mxu0 %v466
    %1287 = vmatpush1.msra.mxu0 %v465
    %1288 = vmatprep.subr.mxu0 %v470
    %1289 = vmatpush1.msra.mxu0 %v469
    %1290 = vmatprep.subr.mxu0 %v474
    %1291 = vmatpush1.msra.mxu0 %v473
    %1292 = vmatprep.subr.mxu0 %v478
    %1293 = vmatpush1.msra.mxu0 %v477
    %1294 = vmatprep.subr.mxu0 %v482
    %1295 = vmatpush1.msra.mxu0 %v481
    %1296 = vmatprep.subr.mxu0 %v486
    %1297 = vmatpush1.msra.mxu0 %v485
    %1298 = vmatprep.subr.mxu0 %v490
    %1299 = vmatpush1.msra.mxu0 %v489
    %1300 = vmatprep.subr.mxu0 %v494
    %1301 = vmatpush1.msra.mxu0 %v493
    %1302 = vmatprep.subr.mxu0 0.0
    %1303 = vmatpush1.msra.mxu0 0.0
    %1304 = vmatprep.subr.mxu0 0.0
    %1305 = vmatpush1.msra.mxu0 0.0
    %1306 = vmatprep.subr.mxu0 0.0
    %1307 = vmatpush1.msra.mxu0 0.0
    %1308 = vmatprep.subr.mxu0 0.0
    %1309 = vmatpush1.msra.mxu0 0.0
    %1310 = vmatprep.subr.mxu0 0.0
    %1311 = vmatpush1.msra.mxu0 0.0
    %1312 = vmatprep.subr.mxu0 0.0
    %1313 = vmatpush1.msra.mxu0 0.0
    %1314 = vmatprep.subr.mxu0 0.0
    %1315 = vmatpush1.msra.mxu0 0.0
    %1316 = vmatprep.subr.mxu0 0.0
    %1317 = vmatpush1.msra.mxu0 0.0
    %1318 = vmatprep.subr.mxu0 0.0
    %1319 = vmatpush1.msra.mxu0 0.0
    %1320 = vmatprep.subr.mxu0 0.0
    %1321 = vmatpush1.msra.mxu0 0.0
    %1322 = vmatprep.subr.mxu0 0.0
    %1323 = vmatpush1.msra.mxu0 0.0
    %1324 = vmatprep.subr.mxu0 0.0
    %1325 = vmatpush1.msra.mxu0 0.0
    %1326 = vmatprep.subr.mxu0 0.0
    %1327 = vmatpush1.msra.mxu0 0.0
    %1328 = vmatprep.subr.mxu0 0.0
    %1329 = vmatpush1.msra.mxu0 0.0
    %1330 = vmatprep.subr.mxu0 0.0
    %1331 = vmatpush1.msra.mxu0 0.0
    %1332 = vmatprep.subr.mxu0 0.0
    %1333 = vmatpush1.msra.mxu0 0.0
    %1334 = vmatprep.mubr.f32.mxu0 0.0
    %1335 = vmatmul.mubr.f32.gmra.mrb[0].mxu0 %v1193
    %v1336 = vpop.f32.mrb[0].mxu0
    %v1337 = vadd.f32 0.0, %v1336
    %v1338 = vpop.f32.mrb[0].mxu0
    %v1339 = vadd.f32 0.0, %v1338
    %1340 = vdwg.mxu0
    %v1341 = vadd.f32 %v1195, %v1266
    %v1342 = vadd.f32 %v1196, %v1268
    %v1343 = vadd.f32 %v1197, %v1337
    %v1344 = vadd.f32 %v1198, %v1339
    %v1345 = vxor.u32 %v1341, 2147483648
    %v1346 = vmul.f32 %v1345, 1.442695
    %v1347 = vpow.pop %v1346
    %v1348 = vadd.f32 %v1347, 1.0
    %v1349 = vrcp.pop %v1348
    %v1350 = vmul.f32 1.0, %v1349
    %v1351 = vxor.u32 %v1342, 2147483648
    %v1352 = vmul.f32 %v1351, 1.442695
    %v1353 = vpow.pop %v1352
    %v1354 = vadd.f32 %v1353, 1.0
    %v1355 = vrcp.pop %v1354
    %v1356 = vmul.f32 1.0, %v1355
    %v1357 = vtanh.pop %v1343
    %v1358 = vxor.u32 %v1344, 2147483648
    %v1359 = vmul.f32 %v1358, 1.442695
    %v1360 = vpow.pop %v1359
    %v1361 = vadd.f32 %v1360, 1.0
    %v1362 = vrcp.pop %v1361
    %v1363 = vmul.f32 1.0, %v1362
    %v1364 = vmul.f32 %v1356, %v1191
    %v1365 = vmul.f32 %v1350, %v1357
    %v1366 = vadd.f32 %v1364, %v1365
    %v1367 = vtanh.pop %v1366
    %v1368 = vmul.f32 %v1363, %v1367
    %s1369 = scalar_lea.vmem [#allocation2], 160
    %v1370 = vld [vmem:[%s1369] sm:$0xff]
    %v1371 = vld [vmem:[%s1369 + $0x8] sm:$0xff]
    %v1372 = vld [vmem:[%s1369 + $0x10] sm:$0xff]
    %v1373 = vld [vmem:[%s1369 + $0x18] sm:$0xff]
    %1374 = vmatprep.subr.mxu0 %v432
    %1375 = vmatpush1.msra.mxu0 %v431
    %1376 = vmatprep.subr.mxu0 %v436
    %1377 = vmatpush1.msra.mxu0 %v435
    %1378 = vmatprep.subr.mxu0 %v440
    %1379 = vmatpush1.msra.mxu0 %v439
    %1380 = vmatprep.subr.mxu0 %v444
    %1381 = vmatpush1.msra.mxu0 %v443
    %1382 = vmatprep.subr.mxu0 %v448
    %1383 = vmatpush1.msra.mxu0 %v447
    %1384 = vmatprep.subr.mxu0 %v452
    %1385 = vmatpush1.msra.mxu0 %v451
    %1386 = vmatprep.subr.mxu0 %v456
    %1387 = vmatpush1.msra.mxu0 %v455
    %1388 = vmatprep.subr.mxu0 %v460
    %1389 = vmatpush1.msra.mxu0 %v459
    %1390 = vmatprep.subr.mxu0 %v464
    %1391 = vmatpush1.msra.mxu0 %v463
    %1392 = vmatprep.subr.mxu0 %v468
    %1393 = vmatpush1.msra.mxu0 %v467
    %1394 = vmatprep.subr.mxu0 %v472
    %1395 = vmatpush1.msra.mxu0 %v471
    %1396 = vmatprep.subr.mxu0 %v476
    %1397 = vmatpush1.msra.mxu0 %v475
    %1398 = vmatprep.subr.mxu0 %v480
    %1399 = vmatpush1.msra.mxu0 %v479
    %1400 = vmatprep.subr.mxu0 %v484
    %1401 = vmatpush1.msra.mxu0 %v483
    %1402 = vmatprep.subr.mxu0 %v488
    %1403 = vmatpush1.msra.mxu0 %v487
    %1404 = vmatprep.subr.mxu0 %v492
    %1405 = vmatpush1.msra.mxu0 %v491
    %1406 = vmatprep.subr.mxu0 0.0
    %1407 = vmatpush1.msra.mxu0 0.0
    %1408 = vmatprep.subr.mxu0 0.0
    %1409 = vmatpush1.msra.mxu0 0.0
    %1410 = vmatprep.subr.mxu0 0.0
    %1411 = vmatpush1.msra.mxu0 0.0
    %1412 = vmatprep.subr.mxu0 0.0
    %1413 = vmatpush1.msra.mxu0 0.0
    %1414 = vmatprep.subr.mxu0 0.0
    %1415 = vmatpush1.msra.mxu0 0.0
    %1416 = vmatprep.subr.mxu0 0.0
    %1417 = vmatpush1.msra.mxu0 0.0
    %1418 = vmatprep.subr.mxu0 0.0
    %1419 = vmatpush1.msra.mxu0 0.0
    %1420 = vmatprep.subr.mxu0 0.0
    %1421 = vmatpush1.msra.mxu0 0.0
    %1422 = vmatprep.subr.mxu0 0.0
    %1423 = vmatpush1.msra.mxu0 0.0
    %1424 = vmatprep.subr.mxu0 0.0
    %1425 = vmatpush1.msra.mxu0 0.0
    %1426 = vmatprep.subr.mxu0 0.0
    %1427 = vmatpush1.msra.mxu0 0.0
    %1428 = vmatprep.subr.mxu0 0.0
    %1429 = vmatpush1.msra.mxu0 0.0
    %1430 = vmatprep.subr.mxu0 0.0
    %1431 = vmatpush1.msra.mxu0 0.0
    %1432 = vmatprep.subr.mxu0 0.0
    %1433 = vmatpush1.msra.mxu0 0.0
    %1434 = vmatprep.subr.mxu0 0.0
    %1435 = vmatpush1.msra.mxu0 0.0
    %1436 = vmatprep.subr.mxu0 0.0
    %1437 = vmatpush1.msra.mxu0 0.0
    %1438 = vmatprep.mubr.f32.mxu0 0.0
    %1439 = vmatmul.mubr.f32.gmra.mrb[0].mxu0 %v1368
    %v1440 = vpop.f32.mrb[0].mxu0
    %v1441 = vadd.f32 0.0, %v1440
    %v1442 = vpop.f32.mrb[0].mxu0
    %v1443 = vadd.f32 0.0, %v1442
    %1444 = vdwg.mxu0
    %1445 = vmatprep.subr.mxu0 %v434
    %1446 = vmatpush1.msra.mxu0 %v433
    %1447 = vmatprep.subr.mxu0 %v438
    %1448 = vmatpush1.msra.mxu0 %v437
    %1449 = vmatprep.subr.mxu0 %v442
    %1450 = vmatpush1.msra.mxu0 %v441
    %1451 = vmatprep.subr.mxu0 %v446
    %1452 = vmatpush1.msra.mxu0 %v445
    %1453 = vmatprep.subr.mxu0 %v450
    %1454 = vmatpush1.msra.mxu0 %v449
    %1455 = vmatprep.subr.mxu0 %v454
    %1456 = vmatpush1.msra.mxu0 %v453
    %1457 = vmatprep.subr.mxu0 %v458
    %1458 = vmatpush1.msra.mxu0 %v457
    %1459 = vmatprep.subr.mxu0 %v462
    %1460 = vmatpush1.msra.mxu0 %v461
    %1461 = vmatprep.subr.mxu0 %v466
    %1462 = vmatpush1.msra.mxu0 %v465
    %1463 = vmatprep.subr.mxu0 %v470
    %1464 = vmatpush1.msra.mxu0 %v469
    %1465 = vmatprep.subr.mxu0 %v474
    %1466 = vmatpush1.msra.mxu0 %v473
    %1467 = vmatprep.subr.mxu0 %v478
    %1468 = vmatpush1.msra.mxu0 %v477
    %1469 = vmatprep.subr.mxu0 %v482
    %1470 = vmatpush1.msra.mxu0 %v481
    %1471 = vmatprep.subr.mxu0 %v486
    %1472 = vmatpush1.msra.mxu0 %v485
    %1473 = vmatprep.subr.mxu0 %v490
    %1474 = vmatpush1.msra.mxu0 %v489
    %1475 = vmatprep.subr.mxu0 %v494
    %1476 = vmatpush1.msra.mxu0 %v493
    %1477 = vmatprep.subr.mxu0 0.0
    %1478 = vmatpush1.msra.mxu0 0.0
    %1479 = vmatprep.subr.mxu0 0.0
    %1480 = vmatpush1.msra.mxu0 0.0
    %1481 = vmatprep.subr.mxu0 0.0
    %1482 = vmatpush1.msra.mxu0 0.0
    %1483 = vmatprep.subr.mxu0 0.0
    %1484 = vmatpush1.msra.mxu0 0.0
    %1485 = vmatprep.subr.mxu0 0.0
    %1486 = vmatpush1.msra.mxu0 0.0
    %1487 = vmatprep.subr.mxu0 0.0
    %1488 = vmatpush1.msra.mxu0 0.0
    %1489 = vmatprep.subr.mxu0 0.0
    %1490 = vmatpush1.msra.mxu0 0.0
    %1491 = vmatprep.subr.mxu0 0.0
    %1492 = vmatpush1.msra.mxu0 0.0
    %1493 = vmatprep.subr.mxu0 0.0
    %1494 = vmatpush1.msra.mxu0 0.0
    %1495 = vmatprep.subr.mxu0 0.0
    %1496 = vmatpush1.msra.mxu0 0.0
    %1497 = vmatprep.subr.mxu0 0.0
    %1498 = vmatpush1.msra.mxu0 0.0
    %1499 = vmatprep.subr.mxu0 0.0
    %1500 = vmatpush1.msra.mxu0 0.0
    %1501 = vmatprep.subr.mxu0 0.0
    %1502 = vmatpush1.msra.mxu0 0.0
    %1503 = vmatprep.subr.mxu0 0.0
    %1504 = vmatpush1.msra.mxu0 0.0
    %1505 = vmatprep.subr.mxu0 0.0
    %1506 = vmatpush1.msra.mxu0 0.0
    %1507 = vmatprep.subr.mxu0 0.0
    %1508 = vmatpush1.msra.mxu0 0.0
    %1509 = vmatprep.mubr.f32.mxu0 0.0
    %1510 = vmatmul.mubr.f32.gmra.mrb[0].mxu0 %v1368
    %v1511 = vpop.f32.mrb[0].mxu0
    %v1512 = vadd.f32 0.0, %v1511
    %v1513 = vpop.f32.mrb[0].mxu0
    %v1514 = vadd.f32 0.0, %v1513
    %1515 = vdwg.mxu0
    %v1516 = vadd.f32 %v1370, %v1441
    %v1517 = vadd.f32 %v1371, %v1443
    %v1518 = vadd.f32 %v1372, %v1512
    %v1519 = vadd.f32 %v1373, %v1514
    %v1520 = vxor.u32 %v1516, 2147483648
    %v1521 = vmul.f32 %v1520, 1.442695
    %v1522 = vpow.pop %v1521
    %v1523 = vadd.f32 %v1522, 1.0
    %v1524 = vrcp.pop %v1523
    %v1525 = vmul.f32 1.0, %v1524
    %v1526 = vxor.u32 %v1517, 2147483648
    %v1527 = vmul.f32 %v1526, 1.442695
    %v1528 = vpow.pop %v1527
    %v1529 = vadd.f32 %v1528, 1.0
    %v1530 = vrcp.pop %v1529
    %v1531 = vmul.f32 1.0, %v1530
    %v1532 = vtanh.pop %v1518
    %v1533 = vxor.u32 %v1519, 2147483648
    %v1534 = vmul.f32 %v1533, 1.442695
    %v1535 = vpow.pop %v1534
    %v1536 = vadd.f32 %v1535, 1.0
    %v1537 = vrcp.pop %v1536
    %v1538 = vmul.f32 1.0, %v1537
    %v1539 = vmul.f32 %v1531, %v1366
    %v1540 = vmul.f32 %v1525, %v1532
    %v1541 = vadd.f32 %v1539, %v1540
    %v1542 = vtanh.pop %v1541
    %v1543 = vmul.f32 %v1538, %v1542
    %s1544 = scalar_lea.vmem [#allocation2], 192
    %v1545 = vld [vmem:[%s1544] sm:$0xff]
    %v1546 = vld [vmem:[%s1544 + $0x8] sm:$0xff]
    %v1547 = vld [vmem:[%s1544 + $0x10] sm:$0xff]
    %v1548 = vld [vmem:[%s1544 + $0x18] sm:$0xff]
    %1549 = vmatprep.subr.mxu0 %v432
    %1550 = vmatpush1.msra.mxu0 %v431
    %1551 = vmatprep.subr.mxu0 %v436
    %1552 = vmatpush1.msra.mxu0 %v435
    %1553 = vmatprep.subr.mxu0 %v440
    %1554 = vmatpush1.msra.mxu0 %v439
    %1555 = vmatprep.subr.mxu0 %v444
    %1556 = vmatpush1.msra.mxu0 %v443
    %1557 = vmatprep.subr.mxu0 %v448
    %1558 = vmatpush1.msra.mxu0 %v447
    %1559 = vmatprep.subr.mxu0 %v452
    %1560 = vmatpush1.msra.mxu0 %v451
    %1561 = vmatprep.subr.mxu0 %v456
    %1562 = vmatpush1.msra.mxu0 %v455
    %1563 = vmatprep.subr.mxu0 %v460
    %1564 = vmatpush1.msra.mxu0 %v459
    %1565 = vmatprep.subr.mxu0 %v464
    %1566 = vmatpush1.msra.mxu0 %v463
    %1567 = vmatprep.subr.mxu0 %v468
    %1568 = vmatpush1.msra.mxu0 %v467
    %1569 = vmatprep.subr.mxu0 %v472
    %1570 = vmatpush1.msra.mxu0 %v471
    %1571 = vmatprep.subr.mxu0 %v476
    %1572 = vmatpush1.msra.mxu0 %v475
    %1573 = vmatprep.subr.mxu0 %v480
    %1574 = vmatpush1.msra.mxu0 %v479
    %1575 = vmatprep.subr.mxu0 %v484
    %1576 = vmatpush1.msra.mxu0 %v483
    %1577 = vmatprep.subr.mxu0 %v488
    %1578 = vmatpush1.msra.mxu0 %v487
    %1579 = vmatprep.subr.mxu0 %v492
    %1580 = vmatpush1.msra.mxu0 %v491
    %1581 = vmatprep.subr.mxu0 0.0
    %1582 = vmatpush1.msra.mxu0 0.0
    %1583 = vmatprep.subr.mxu0 0.0
    %1584 = vmatpush1.msra.mxu0 0.0
    %1585 = vmatprep.subr.mxu0 0.0
    %1586 = vmatpush1.msra.mxu0 0.0
    %1587 = vmatprep.subr.mxu0 0.0
    %1588 = vmatpush1.msra.mxu0 0.0
    %1589 = vmatprep.subr.mxu0 0.0
    %1590 = vmatpush1.msra.mxu0 0.0
    %1591 = vmatprep.subr.mxu0 0.0
    %1592 = vmatpush1.msra.mxu0 0.0
    %1593 = vmatprep.subr.mxu0 0.0
    %1594 = vmatpush1.msra.mxu0 0.0
    %1595 = vmatprep.subr.mxu0 0.0
    %1596 = vmatpush1.msra.mxu0 0.0
    %1597 = vmatprep.subr.mxu0 0.0
    %1598 = vmatpush1.msra.mxu0 0.0
    %1599 = vmatprep.subr.mxu0 0.0
    %1600 = vmatpush1.msra.mxu0 0.0
    %1601 = vmatprep.subr.mxu0 0.0
    %1602 = vmatpush1.msra.mxu0 0.0
    %1603 = vmatprep.subr.mxu0 0.0
    %1604 = vmatpush1.msra.mxu0 0.0
    %1605 = vmatprep.subr.mxu0 0.0
    %1606 = vmatpush1.msra.mxu0 0.0
    %1607 = vmatprep.subr.mxu0 0.0
    %1608 = vmatpush1.msra.mxu0 0.0
    %1609 = vmatprep.subr.mxu0 0.0
    %1610 = vmatpush1.msra.mxu0 0.0
    %1611 = vmatprep.subr.mxu0 0.0
    %1612 = vmatpush1.msra.mxu0 0.0
    %1613 = vmatprep.mubr.f32.mxu0 0.0
    %1614 = vmatmul.mubr.f32.gmra.mrb[0].mxu0 %v1543
    %v1615 = vpop.f32.mrb[0].mxu0
    %v1616 = vadd.f32 0.0, %v1615
    %v1617 = vpop.f32.mrb[0].mxu0
    %v1618 = vadd.f32 0.0, %v1617
    %1619 = vdwg.mxu0
    %1620 = vmatprep.subr.mxu0 %v434
    %1621 = vmatpush1.msra.mxu0 %v433
    %1622 = vmatprep.subr.mxu0 %v438
    %1623 = vmatpush1.msra.mxu0 %v437
    %1624 = vmatprep.subr.mxu0 %v442
    %1625 = vmatpush1.msra.mxu0 %v441
    %1626 = vmatprep.subr.mxu0 %v446
    %1627 = vmatpush1.msra.mxu0 %v445
    %1628 = vmatprep.subr.mxu0 %v450
    %1629 = vmatpush1.msra.mxu0 %v449
    %1630 = vmatprep.subr.mxu0 %v454
    %1631 = vmatpush1.msra.mxu0 %v453
    %1632 = vmatprep.subr.mxu0 %v458
    %1633 = vmatpush1.msra.mxu0 %v457
    %1634 = vmatprep.subr.mxu0 %v462
    %1635 = vmatpush1.msra.mxu0 %v461
    %1636 = vmatprep.subr.mxu0 %v466
    %1637 = vmatpush1.msra.mxu0 %v465
    %1638 = vmatprep.subr.mxu0 %v470
    %1639 = vmatpush1.msra.mxu0 %v469
    %1640 = vmatprep.subr.mxu0 %v474
    %1641 = vmatpush1.msra.mxu0 %v473
    %1642 = vmatprep.subr.mxu0 %v478
    %1643 = vmatpush1.msra.mxu0 %v477
    %1644 = vmatprep.subr.mxu0 %v482
    %1645 = vmatpush1.msra.mxu0 %v481
    %1646 = vmatprep.subr.mxu0 %v486
    %1647 = vmatpush1.msra.mxu0 %v485
    %1648 = vmatprep.subr.mxu0 %v490
    %1649 = vmatpush1.msra.mxu0 %v489
    %1650 = vmatprep.subr.mxu0 %v494
    %1651 = vmatpush1.msra.mxu0 %v493
    %1652 = vmatprep.subr.mxu0 0.0
    %1653 = vmatpush1.msra.mxu0 0.0
    %1654 = vmatprep.subr.mxu0 0.0
    %1655 = vmatpush1.msra.mxu0 0.0
    %1656 = vmatprep.subr.mxu0 0.0
    %1657 = vmatpush1.msra.mxu0 0.0
    %1658 = vmatprep.subr.mxu0 0.0
    %1659 = vmatpush1.msra.mxu0 0.0
    %1660 = vmatprep.subr.mxu0 0.0
    %1661 = vmatpush1.msra.mxu0 0.0
    %1662 = vmatprep.subr.mxu0 0.0
    %1663 = vmatpush1.msra.mxu0 0.0
    %1664 = vmatprep.subr.mxu0 0.0
    %1665 = vmatpush1.msra.mxu0 0.0
    %1666 = vmatprep.subr.mxu0 0.0
    %1667 = vmatpush1.msra.mxu0 0.0
    %1668 = vmatprep.subr.mxu0 0.0
    %1669 = vmatpush1.msra.mxu0 0.0
    %1670 = vmatprep.subr.mxu0 0.0
    %1671 = vmatpush1.msra.mxu0 0.0
    %1672 = vmatprep.subr.mxu0 0.0
    %1673 = vmatpush1.msra.mxu0 0.0
    %1674 = vmatprep.subr.mxu0 0.0
    %1675 = vmatpush1.msra.mxu0 0.0
    %1676 = vmatprep.subr.mxu0 0.0
    %1677 = vmatpush1.msra.mxu0 0.0
    %1678 = vmatprep.subr.mxu0 0.0
    %1679 = vmatpush1.msra.mxu0 0.0
    %1680 = vmatprep.subr.mxu0 0.0
    %1681 = vmatpush1.msra.mxu0 0.0
    %1682 = vmatprep.subr.mxu0 0.0
    %1683 = vmatpush1.msra.mxu0 0.0
    %1684 = vmatprep.mubr.f32.mxu0 0.0
    %1685 = vmatmul.mubr.f32.gmra.mrb[0].mxu0 %v1543
    %v1686 = vpop.f32.mrb[0].mxu0
    %v1687 = vadd.f32 0.0, %v1686
    %v1688 = vpop.f32.mrb[0].mxu0
    %v1689 = vadd.f32 0.0, %v1688
    %1690 = vdwg.mxu0
    %v1691 = vadd.f32 %v1545, %v1616
    %v1692 = vadd.f32 %v1546, %v1618
    %v1693 = vadd.f32 %v1547, %v1687
    %v1694 = vadd.f32 %v1548, %v1689
    %v1695 = vxor.u32 %v1691, 2147483648
    %v1696 = vmul.f32 %v1695, 1.442695
    %v1697 = vpow.pop %v1696
    %v1698 = vadd.f32 %v1697, 1.0
    %v1699 = vrcp.pop %v1698
    %v1700 = vmul.f32 1.0, %v1699
    %v1701 = vxor.u32 %v1692, 2147483648
    %v1702 = vmul.f32 %v1701, 1.442695
    %v1703 = vpow.pop %v1702
    %v1704 = vadd.f32 %v1703, 1.0
    %v1705 = vrcp.pop %v1704
    %v1706 = vmul.f32 1.0, %v1705
    %v1707 = vtanh.pop %v1693
    %v1708 = vxor.u32 %v1694, 2147483648
    %v1709 = vmul.f32 %v1708, 1.442695
    %v1710 = vpow.pop %v1709
    %v1711 = vadd.f32 %v1710, 1.0
    %v1712 = vrcp.pop %v1711
    %v1713 = vmul.f32 1.0, %v1712
    %v1714 = vmul.f32 %v1706, %v1541
    %v1715 = vmul.f32 %v1700, %v1707
    %v1716 = vadd.f32 %v1714, %v1715
    %v1717 = vtanh.pop %v1716
    %v1718 = vmul.f32 %v1713, %v1717
    %s1719 = scalar_lea.vmem [#allocation2], 224
    %v1720 = vld [vmem:[%s1719] sm:$0xff]
    %v1721 = vld [vmem:[%s1719 + $0x8] sm:$0xff]
    %v1722 = vld [vmem:[%s1719 + $0x10] sm:$0xff]
    %v1723 = vld [vmem:[%s1719 + $0x18] sm:$0xff]
    %1724 = vmatprep.subr.mxu0 %v432
    %1725 = vmatpush1.msra.mxu0 %v431
    %1726 = vmatprep.subr.mxu0 %v436
    %1727 = vmatpush1.msra.mxu0 %v435
    %1728 = vmatprep.subr.mxu0 %v440
    %1729 = vmatpush1.msra.mxu0 %v439
    %1730 = vmatprep.subr.mxu0 %v444
    %1731 = vmatpush1.msra.mxu0 %v443
    %1732 = vmatprep.subr.mxu0 %v448
    %1733 = vmatpush1.msra.mxu0 %v447
    %1734 = vmatprep.subr.mxu0 %v452
    %1735 = vmatpush1.msra.mxu0 %v451
    %1736 = vmatprep.subr.mxu0 %v456
    %1737 = vmatpush1.msra.mxu0 %v455
    %1738 = vmatprep.subr.mxu0 %v460
    %1739 = vmatpush1.msra.mxu0 %v459
    %1740 = vmatprep.subr.mxu0 %v464
    %1741 = vmatpush1.msra.mxu0 %v463
    %1742 = vmatprep.subr.mxu0 %v468
    %1743 = vmatpush1.msra.mxu0 %v467
    %1744 = vmatprep.subr.mxu0 %v472
    %1745 = vmatpush1.msra.mxu0 %v471
    %1746 = vmatprep.subr.mxu0 %v476
    %1747 = vmatpush1.msra.mxu0 %v475
    %1748 = vmatprep.subr.mxu0 %v480
    %1749 = vmatpush1.msra.mxu0 %v479
    %1750 = vmatprep.subr.mxu0 %v484
    %1751 = vmatpush1.msra.mxu0 %v483
    %1752 = vmatprep.subr.mxu0 %v488
    %1753 = vmatpush1.msra.mxu0 %v487
    %1754 = vmatprep.subr.mxu0 %v492
    %1755 = vmatpush1.msra.mxu0 %v491
    %1756 = vmatprep.subr.mxu0 0.0
    %1757 = vmatpush1.msra.mxu0 0.0
    %1758 = vmatprep.subr.mxu0 0.0
    %1759 = vmatpush1.msra.mxu0 0.0
    %1760 = vmatprep.subr.mxu0 0.0
    %1761 = vmatpush1.msra.mxu0 0.0
    %1762 = vmatprep.subr.mxu0 0.0
    %1763 = vmatpush1.msra.mxu0 0.0
    %1764 = vmatprep.subr.mxu0 0.0
    %1765 = vmatpush1.msra.mxu0 0.0
    %1766 = vmatprep.subr.mxu0 0.0
    %1767 = vmatpush1.msra.mxu0 0.0
    %1768 = vmatprep.subr.mxu0 0.0
    %1769 = vmatpush1.msra.mxu0 0.0
    %1770 = vmatprep.subr.mxu0 0.0
    %1771 = vmatpush1.msra.mxu0 0.0
    %1772 = vmatprep.subr.mxu0 0.0
    %1773 = vmatpush1.msra.mxu0 0.0
    %1774 = vmatprep.subr.mxu0 0.0
    %1775 = vmatpush1.msra.mxu0 0.0
    %1776 = vmatprep.subr.mxu0 0.0
    %1777 = vmatpush1.msra.mxu0 0.0
    %1778 = vmatprep.subr.mxu0 0.0
    %1779 = vmatpush1.msra.mxu0 0.0
    %1780 = vmatprep.subr.mxu0 0.0
    %1781 = vmatpush1.msra.mxu0 0.0
    %1782 = vmatprep.subr.mxu0 0.0
    %1783 = vmatpush1.msra.mxu0 0.0
    %1784 = vmatprep.subr.mxu0 0.0
    %1785 = vmatpush1.msra.mxu0 0.0
    %1786 = vmatprep.subr.mxu0 0.0
    %1787 = vmatpush1.msra.mxu0 0.0
    %1788 = vmatprep.mubr.f32.mxu0 0.0
    %1789 = vmatmul.mubr.f32.gmra.mrb[0].mxu0 %v1718
    %v1790 = vpop.f32.mrb[0].mxu0
    %v1791 = vadd.f32 0.0, %v1790
    %v1792 = vpop.f32.mrb[0].mxu0
    %v1793 = vadd.f32 0.0, %v1792
    %1794 = vdwg.mxu0
    %1795 = vmatprep.subr.mxu0 %v434
    %1796 = vmatpush1.msra.mxu0 %v433
    %1797 = vmatprep.subr.mxu0 %v438
    %1798 = vmatpush1.msra.mxu0 %v437
    %1799 = vmatprep.subr.mxu0 %v442
    %1800 = vmatpush1.msra.mxu0 %v441
    %1801 = vmatprep.subr.mxu0 %v446
    %1802 = vmatpush1.msra.mxu0 %v445
    %1803 = vmatprep.subr.mxu0 %v450
    %1804 = vmatpush1.msra.mxu0 %v449
    %1805 = vmatprep.subr.mxu0 %v454
    %1806 = vmatpush1.msra.mxu0 %v453
    %1807 = vmatprep.subr.mxu0 %v458
    %1808 = vmatpush1.msra.mxu0 %v457
    %1809 = vmatprep.subr.mxu0 %v462
    %1810 = vmatpush1.msra.mxu0 %v461
    %1811 = vmatprep.subr.mxu0 %v466
    %1812 = vmatpush1.msra.mxu0 %v465
    %1813 = vmatprep.subr.mxu0 %v470
    %1814 = vmatpush1.msra.mxu0 %v469
    %1815 = vmatprep.subr.mxu0 %v474
    %1816 = vmatpush1.msra.mxu0 %v473
    %1817 = vmatprep.subr.mxu0 %v478
    %1818 = vmatpush1.msra.mxu0 %v477
    %1819 = vmatprep.subr.mxu0 %v482
    %1820 = vmatpush1.msra.mxu0 %v481
    %1821 = vmatprep.subr.mxu0 %v486
    %1822 = vmatpush1.msra.mxu0 %v485
    %1823 = vmatprep.subr.mxu0 %v490
    %1824 = vmatpush1.msra.mxu0 %v489
    %1825 = vmatprep.subr.mxu0 %v494
    %1826 = vmatpush1.msra.mxu0 %v493
    %1827 = vmatprep.subr.mxu0 0.0
    %1828 = vmatpush1.msra.mxu0 0.0
    %1829 = vmatprep.subr.mxu0 0.0
    %1830 = vmatpush1.msra.mxu0 0.0
    %1831 = vmatprep.subr.mxu0 0.0
    %1832 = vmatpush1.msra.mxu0 0.0
    %1833 = vmatprep.subr.mxu0 0.0
    %1834 = vmatpush1.msra.mxu0 0.0
    %1835 = vmatprep.subr.mxu0 0.0
    %1836 = vmatpush1.msra.mxu0 0.0
    %1837 = vmatprep.subr.mxu0 0.0
    %1838 = vmatpush1.msra.mxu0 0.0
    %1839 = vmatprep.subr.mxu0 0.0
    %1840 = vmatpush1.msra.mxu0 0.0
    %1841 = vmatprep.subr.mxu0 0.0
    %1842 = vmatpush1.msra.mxu0 0.0
    %1843 = vmatprep.subr.mxu0 0.0
    %1844 = vmatpush1.msra.mxu0 0.0
    %1845 = vmatprep.subr.mxu0 0.0
    %1846 = vmatpush1.msra.mxu0 0.0
    %1847 = vmatprep.subr.mxu0 0.0
    %1848 = vmatpush1.msra.mxu0 0.0
    %1849 = vmatprep.subr.mxu0 0.0
    %1850 = vmatpush1.msra.mxu0 0.0
    %1851 = vmatprep.subr.mxu0 0.0
    %1852 = vmatpush1.msra.mxu0 0.0
    %1853 = vmatprep.subr.mxu0 0.0
    %1854 = vmatpush1.msra.mxu0 0.0
    %1855 = vmatprep.subr.mxu0 0.0
    %1856 = vmatpush1.msra.mxu0 0.0
    %1857 = vmatprep.subr.mxu0 0.0
    %1858 = vmatpush1.msra.mxu0 0.0
    %1859 = vmatprep.mubr.f32.mxu0 0.0
    %1860 = vmatmul.mubr.f32.gmra.mrb[0].mxu0 %v1718
    %v1861 = vpop.f32.mrb[0].mxu0
    %v1862 = vadd.f32 0.0, %v1861
    %v1863 = vpop.f32.mrb[0].mxu0
    %v1864 = vadd.f32 0.0, %v1863
    %1865 = vdwg.mxu0
    %v1866 = vadd.f32 %v1720, %v1791
    %v1867 = vadd.f32 %v1721, %v1793
    %v1868 = vadd.f32 %v1722, %v1862
    %v1869 = vadd.f32 %v1723, %v1864
    %v1870 = vxor.u32 %v1866, 2147483648
    %v1871 = vmul.f32 %v1870, 1.442695
    %v1872 = vpow.pop %v1871
    %v1873 = vadd.f32 %v1872, 1.0
    %v1874 = vrcp.pop %v1873
    %v1875 = vmul.f32 1.0, %v1874
    %v1876 = vxor.u32 %v1867, 2147483648
    %v1877 = vmul.f32 %v1876, 1.442695
    %v1878 = vpow.pop %v1877
    %v1879 = vadd.f32 %v1878, 1.0
    %v1880 = vrcp.pop %v1879
    %v1881 = vmul.f32 1.0, %v1880
    %v1882 = vtanh.pop %v1868
    %v1883 = vxor.u32 %v1869, 2147483648
    %v1884 = vmul.f32 %v1883, 1.442695
    %v1885 = vpow.pop %v1884
    %v1886 = vadd.f32 %v1885, 1.0
    %v1887 = vrcp.pop %v1886
    %v1888 = vmul.f32 1.0, %v1887
    %v1889 = vmul.f32 %v1881, %v1716
    %v1890 = vmul.f32 %v1875, %v1882
    %v1891 = vadd.f32 %v1889, %v1890
    %v1892 = vtanh.pop %v1891
    %v1893 = vmul.f32 %v1888, %v1892
    %v1894 = vld [vmem:[#allocation9] sm:$0xff]
    %v1895 = vld [vmem:[#allocation9 + $0x8] sm:$0xff]
    %v1896 = vld [vmem:[#allocation9 + $0x10] sm:$0xff]
    %v1897 = vld [vmem:[#allocation9 + $0x18] sm:$0xff]
    %v1898 = vld [vmem:[#allocation9 + $0x20] sm:$0xff]
    %v1899 = vld [vmem:[#allocation9 + $0x28] sm:$0xff]
    %v1900 = vld [vmem:[#allocation9 + $0x30] sm:$0xff]
    %v1901 = vld [vmem:[#allocation9 + $0x38] sm:$0xff]
    %v1902 = vld [vmem:[#allocation9 + $0x40] sm:$0xff]
    %v1903 = vld [vmem:[#allocation9 + $0x48] sm:$0xff]
    %v1904 = vld [vmem:[#allocation9 + $0x50] sm:$0xff]
    %v1905 = vld [vmem:[#allocation9 + $0x58] sm:$0xff]
    %v1906 = vld [vmem:[#allocation9 + $0x60] sm:$0xff]
    %v1907 = vld [vmem:[#allocation9 + $0x68] sm:$0xff]
    %v1908 = vld [vmem:[#allocation9 + $0x70] sm:$0xff]
    %v1909 = vld [vmem:[#allocation9 + $0x78] sm:$0xff]
    %v1910 = vld [vmem:[%s5] sm:$0x1]
    %v1912 = vlaneseq
    %v1913 = vshrl.u32 %v1912, 7
    %v1914 = vsub.s32 0, %v1913
    %v1915 = vrot.slane %v1910, %v1914
    %1917 = vmatprep.subr.mxu0 0.0
    %1918 = vmatpush1.msra.mxu0 %v1894
    %1919 = vmatprep.subr.mxu0 0.0
    %1920 = vmatpush1.msra.mxu0 %v1895
    %1921 = vmatprep.subr.mxu0 0.0
    %1922 = vmatpush1.msra.mxu0 %v1896
    %1923 = vmatprep.subr.mxu0 0.0
    %1924 = vmatpush1.msra.mxu0 %v1897
    %1925 = vmatprep.subr.mxu0 0.0
    %1926 = vmatpush1.msra.mxu0 %v1898
    %1927 = vmatprep.subr.mxu0 0.0
    %1928 = vmatpush1.msra.mxu0 %v1899
    %1929 = vmatprep.subr.mxu0 0.0
    %1930 = vmatpush1.msra.mxu0 %v1900
    %1931 = vmatprep.subr.mxu0 0.0
    %1932 = vmatpush1.msra.mxu0 %v1901
    %1933 = vmatprep.subr.mxu0 0.0
    %1934 = vmatpush1.msra.mxu0 %v1902
    %1935 = vmatprep.subr.mxu0 0.0
    %1936 = vmatpush1.msra.mxu0 %v1903
    %1937 = vmatprep.subr.mxu0 0.0
    %1938 = vmatpush1.msra.mxu0 %v1904
    %1939 = vmatprep.subr.mxu0 0.0
    %1940 = vmatpush1.msra.mxu0 %v1905
    %1941 = vmatprep.subr.mxu0 0.0
    %1942 = vmatpush1.msra.mxu0 %v1906
    %1943 = vmatprep.subr.mxu0 0.0
    %1944 = vmatpush1.msra.mxu0 %v1907
    %1945 = vmatprep.subr.mxu0 0.0
    %1946 = vmatpush1.msra.mxu0 %v1908
    %1947 = vmatprep.subr.mxu0 0.0
    %1948 = vmatpush1.msra.mxu0 %v1909
    %1949 = vmatprep.subr.mxu0 0.0
    %1950 = vmatpush1.msra.mxu0 0.0
    %1951 = vmatprep.subr.mxu0 0.0
    %1952 = vmatpush1.msra.mxu0 0.0
    %1953 = vmatprep.subr.mxu0 0.0
    %1954 = vmatpush1.msra.mxu0 0.0
    %1955 = vmatprep.subr.mxu0 0.0
    %1956 = vmatpush1.msra.mxu0 0.0
    %1957 = vmatprep.subr.mxu0 0.0
    %1958 = vmatpush1.msra.mxu0 0.0
    %1959 = vmatprep.subr.mxu0 0.0
    %1960 = vmatpush1.msra.mxu0 0.0
    %1961 = vmatprep.subr.mxu0 0.0
    %1962 = vmatpush1.msra.mxu0 0.0
    %1963 = vmatprep.subr.mxu0 0.0
    %1964 = vmatpush1.msra.mxu0 0.0
    %1965 = vmatprep.subr.mxu0 0.0
    %1966 = vmatpush1.msra.mxu0 0.0
    %1967 = vmatprep.subr.mxu0 0.0
    %1968 = vmatpush1.msra.mxu0 0.0
    %1969 = vmatprep.subr.mxu0 0.0
    %1970 = vmatpush1.msra.mxu0 0.0
    %1971 = vmatprep.subr.mxu0 0.0
    %1972 = vmatpush1.msra.mxu0 0.0
    %1973 = vmatprep.subr.mxu0 0.0
    %1974 = vmatpush1.msra.mxu0 0.0
    %1975 = vmatprep.subr.mxu0 0.0
    %1976 = vmatpush1.msra.mxu0 0.0
    %1977 = vmatprep.subr.mxu0 0.0
    %1978 = vmatpush1.msra.mxu0 0.0
    %1979 = vmatprep.subr.mxu0 0.0
    %1980 = vmatpush1.msra.mxu0 0.0
    %1981 = vmatprep.mubr.f32.mxu0 0.0
    %1982 = vmatmul.mubr.f32.gmra.mrb[0].mxu0 %v1893
    %v1983 = vpop.f32.mrb[0].mxu0
    %v1984 = vadd.f32 %v1915, %v1983
    %v1985 = vpop.f32.mrb[0].mxu0
    %1986 = vdwg.mxu0
    %1987 = vst [vmem:[#allocation11] sm:$0xff] %v1984
    // Predicated region
    $region42: #{tpu_custom_call.1} parent=1 // pred_check
      _
    $region43: #{tpu_custom_call.1} parent=1 // pred_check_branch
      %1989 = sbr.rel (0) target = $region45
    $region44: #{tpu_custom_call.1} parent=1 // pred_region
      %s1991 = ssub.s32 128, 128
      %1992 = vsyncadd [#allocation5], %s1991
      %s1994 = sshll.u32 [#allocation11], 4
      %s1995 = int_to_ptr.vmem [resolvable:$true] %s1994
      %1997 = dma.vmem_to_hbm [thread:$0]  %s1995, 128, %s6, [#allocation5]
    $region45: #{tpu_custom_call.1} parent=1 // pred_fallthru
      _
    // Predicated region
    $region46: #{tpu_custom_call.1} parent=1 // pred_check
      _
    $region47: #{tpu_custom_call.1} parent=1 // pred_check_branch
      %1999 = sbr.rel (0) target = $region49
    $region48: #{tpu_custom_call.1} parent=1 // pred_region
      %2000 = dma.done [#allocation5], 128
    $region49: #{tpu_custom_call.1} parent=1 // pred_fallthru
      _
    %2001 = vsyncpa [#allocation4], 1
    %2002 = vsyncpa [#allocation7], 1
    %2003 = vsyncpa [#allocation10], 1
    %2004 = vsyncpa [#allocation5], 1

</llo_original>
